<compile_context>
chip_gen: v6e
topology: v6e:2x2x1
jax: 0.10.0
libtpu: 0.0.40
codegen_flags: <defaults>
</compile_context>

<pallas_src>
import functools

import jax
import jax.numpy as jnp
from jax.experimental import pallas as pl
from jax.experimental.pallas import tpu as pltpu

ALPHA = 0.9
GAMMA = 0.1
LAMDA = 0.5
DROPOUT = 0.6        # eval mode -> dropout is identity
NEG_INF = -1e30
VMEM_LIMIT = 48 * 1024 * 1024   # leaves headroom on v7x's 64 MiB physical VMEM


# ------------------------------ Pallas kernels ------------------------------

def prep_kernel(a_s_ref, xcol_ref, xrow_ref, deg_ref, w0_ref, b0_ref,
                whp_ref, bhp_ref, x1_ref, x1bf_ref, lx_ref, acc_ref):
    """Fused conv0 + high-pass (Laplacian) branch.

    Accumulates A_s @ x over the k grid axis; at the last k step emits
      x1   = relu(x_row @ W0 + b0)       (f32 + bf16 copy for kernel 2)
      lx   = relu((deg_s * x_row - A_s @ x) @ Whp + bhp)
    All matmuls take bf16 operands with f32 MXU accumulation.
    """
    k = pl.program_id(1)

    @pl.when(k == 0)
    def _():
        acc_ref[...] = jnp.zeros_like(acc_ref)

    # (tm, tk) bf16 x (tk, Fp) bf16 -> f32 accumulation on the MXU.
    acc_ref[...] += jnp.dot(a_s_ref[...], xcol_ref[...],
                            preferred_element_type=jnp.float32)

    @pl.when(k == pl.num_programs(1) - 1)
    def _():
        x_row = xrow_ref[...]                                   # bf16
        x1 = jnp.maximum(
            jnp.dot(x_row, w0_ref[...], preferred_element_type=jnp.float32)
            + b0_ref[...], 0.0)
        x1_ref[...] = x1
        x1bf_ref[...] = x1.astype(jnp.bfloat16)
        # L @ x = D_s x - A_s x   (no dense Laplacian materialized)
        lx_pre = deg_ref[...] * x_row.astype(jnp.float32) - acc_ref[...]
        lx_ref[...] = jnp.maximum(
            jnp.dot(lx_pre.astype(jnp.bfloat16), whp_ref[...],
                    preferred_element_type=jnp.float32) + bhp_ref[...], 0.0)


def layers_kernel(a_ref, h0c_ref, h0r_ref, lxr_ref, wp_ref, wl_ref, bl_ref,
                  out_ref, acc_ref, hbuf_ref, logit_ref, out_sem,
                  *, alpha, gamma, n, tm, tk):
    """All nlayer residual GCN convs + final linear + log_softmax, one call.

    grid = (nlayer, Np/tm, Np/tk). A_hat is streamed tile-by-tile (bf16); the
    evolving h lives in a bf16 (2*Np, H) VMEM double buffer. Layer 0 reads its
    h columns directly from the tiled bf16 x1 input. The per-layer residual
    mix is pre-folded into wp_ref: W' = (1-beta) I + beta W. The output is an
    HBM ref (pl.ANY) written by manual DMA only at the last layer.
    """
    l = pl.program_id(0)
    i = pl.program_id(1)
    k = pl.program_id(2)
    nl = pl.num_programs(0)
    nk = pl.num_programs(2)

    @pl.when(k == 0)
    def _():
        acc_ref[...] = jnp.zeros_like(acc_ref)

    # --- contraction step: A_hat tile @ h tile (bf16, f32 accumulate) ------
    @pl.when(l == 0)
    def _():
        acc_ref[...] += jnp.dot(a_ref[...], h0c_ref[...],
                                preferred_element_type=jnp.float32)

    @pl.when(l > 0)
    def _():
        # h_l lives in slot (l+1) % 2 of the (2*Np, H) bf16 double buffer.
        read_off = pl.multiple_of(((l + 1) % 2) * n + k * tk, tk)
        h_src = hbuf_ref[pl.ds(read_off, tk), :]
        acc_ref[...] += jnp.dot(a_ref[...], h_src,
                                preferred_element_type=jnp.float32)

    # --- row-tile epilogue ---------------------------------------------------
    @pl.when(k == nk - 1)
    def _():
        support = ((1.0 - alpha) * acc_ref[...]
                   + alpha * h0r_ref[...] + gamma * lxr_ref[...])
        h_new = jnp.maximum(
            jnp.dot(support.astype(jnp.bfloat16), wp_ref[...],
                    preferred_element_type=jnp.float32), 0.0)

        @pl.when(l < nl - 1)
        def _():
            write_off = pl.multiple_of((l % 2) * n + i * tm, tm)
            hbuf_ref[pl.ds(write_off, tm), :] = h_new.astype(jnp.bfloat16)

        @pl.when(l == nl - 1)
        def _():
            logits = jnp.dot(h_new.astype(jnp.bfloat16), wl_ref[...],
                             preferred_element_type=jnp.float32) + bl_ref[...]
            m = jnp.max(logits, axis=1, keepdims=True)
            z = logits - m
            lse = jnp.log(jnp.sum(jnp.exp(z), axis=1, keepdims=True))
            logit_ref[...] = z - lse
            # Manual DMA of only the final logits tile -> no intermediate-layer
            # HBM writeback.
            row0 = pl.multiple_of(i * tm, tm)
            cp_out = pltpu.make_async_copy(
                logit_ref, out_ref.at[pl.ds(row0, tm), :], out_sem)
            cp_out.start()
            cp_out.wait()


# ------------------------------ wrapper glue ---------------------------------

def _round_up(x, m):
    return ((x + m - 1) // m) * m


def _choose_tile(n):
    # 256 fills the v6e/v7x 256-wide MXU and amortizes per-step overhead;
    # still fine on v5e (4x128 MXU handles 256-deep contractions natively).
    t = 256 if n >= 256 else 128
    return t, _round_up(n, t)


def _pad2(a, rows, cols):
    return jnp.pad(a, ((0, rows - a.shape[0]), (0, cols - a.shape[1])))


def res_gcn_forward(params, x_raw, a_s, a_hat, deg_s):
    n, feat = x_raw.shape
    w0, b0 = params["conv0"]
    whp, bhp = params["hpconv"]
    wl, bl = params["conv_last"]
    hdim = w0.shape[1]
    ncls = wl.shape[1]
    nlayer = len(params["gconvs"])
    assert nlayer >= 1

    tile, n_pad = _choose_tile(n)
    tm = tk = tile
    feat_p = _round_up(feat, 128)
    cp = _round_up(ncls, 128)

    bf = jnp.bfloat16
    # bf16 for all MXU operands (f32 accumulation); zero-pad to tile-aligned N
    # and lane-aligned feature/class dims. Padded rows/cols are zero in the
    # adjacency matrices, so they never leak into real rows.
    a_s_bf = _pad2(a_s, n_pad, n_pad).astype(bf)
    a_hat_bf = _pad2(a_hat, n_pad, n_pad).astype(bf)
    x_bf = _pad2(x_raw, n_pad, feat_p).astype(bf)
    deg_p = _pad2(deg_s, n_pad, 1)
    w0_bf = _pad2(w0, feat_p, hdim).astype(bf)
    whp_bf = _pad2(whp, feat_p, hdim).astype(bf)

    # Fold the per-layer residual mix into the weight:
    #   (1-beta)*s + beta*(s @ W)  ==  s @ ((1-beta) I + beta W)
    eye = jnp.eye(hdim, dtype=jnp.float32)
    wp_stack = jnp.stack(
        [(1.0 - LAMDA / (i + 2)) * eye + (LAMDA / (i + 2)) * w
         for i, w in enumerate(params["gconvs"])]).astype(bf)

    # Classifier padded to a lane-dense (multiple-of-128) output; padded logit
    # columns get a -1e30 bias so they vanish under log_softmax.
    wl_pad = jnp.zeros((hdim, cp), jnp.float32).at[:, :ncls].set(wl).astype(bf)
    bl_pad = jnp.full((1, cp), NEG_INF, jnp.float32).at[:, :ncls].set(bl)

    cparams_prep = pltpu.CompilerParams(
        dimension_semantics=("parallel", "arbitrary"),
        vmem_limit_bytes=VMEM_LIMIT)
    cparams_layers = pltpu.CompilerParams(
        dimension_semantics=("arbitrary", "arbitrary", "arbitrary"),
        vmem_limit_bytes=VMEM_LIMIT)

    # ---- kernel 1: fused conv0 + high-pass (Laplacian) branch --------------
    x1, x1_bf, lx = pl.pallas_call(
        prep_kernel,
        out_shape=(jax.ShapeDtypeStruct((n_pad, hdim), jnp.float32),
                   jax.ShapeDtypeStruct((n_pad, hdim), jnp.bfloat16),
                   jax.ShapeDtypeStruct((n_pad, hdim), jnp.float32)),
        grid_spec=pltpu.PrefetchScalarGridSpec(
            num_scalar_prefetch=0,
            grid=(n_pad // tm, n_pad // tk),
            in_specs=[
                pl.BlockSpec((tm, tk), lambda i, k: (i, k)),        # A_s bf16
                pl.BlockSpec((tk, feat_p), lambda i, k: (k, 0)),    # x cols bf16
                pl.BlockSpec((tm, feat_p), lambda i, k: (i, 0)),    # x rows bf16
                pl.BlockSpec((tm, 1), lambda i, k: (i, 0)),         # deg_s
                pl.BlockSpec((feat_p, hdim), lambda i, k: (0, 0)),  # W0 bf16
                pl.BlockSpec((1, hdim), lambda i, k: (0, 0)),       # b0
                pl.BlockSpec((feat_p, hdim), lambda i, k: (0, 0)),  # Whp bf16
                pl.BlockSpec((1, hdim), lambda i, k: (0, 0)),       # bhp
            ],
            out_specs=(
                pl.BlockSpec((tm, hdim), lambda i, k: (i, 0)),      # x1 (f32)
                pl.BlockSpec((tm, hdim), lambda i, k: (i, 0)),      # x1 (bf16)
                pl.BlockSpec((tm, hdim), lambda i, k: (i, 0)),      # lx (f32)
            ),
            scratch_shapes=[pltpu.VMEM((tm, feat_p), jnp.float32)],
        ),
        compiler_params=cparams_prep,
    )(a_s_bf, x_bf, x_bf, deg_p, w0_bf, b0, whp_bf, bhp)

    # ---- kernel 2: all GCN layers + classifier + log_softmax ---------------
    kern = functools.partial(layers_kernel, alpha=ALPHA, gamma=GAMMA,
                             n=n_pad, tm=tm, tk=tk)
    out_pad = pl.pallas_call(
        kern,
        out_shape=jax.ShapeDtypeStruct((n_pad, cp), jnp.float32),
        grid_spec=pltpu.PrefetchScalarGridSpec(
            num_scalar_prefetch=0,
            grid=(nlayer, n_pad // tm, n_pad // tk),
            in_specs=[
                pl.BlockSpec((tm, tk), lambda l, i, k: (i, k)),     # A_hat bf16
                # h0 columns (bf16): streamed per k only at layer 0, pinned to
                # block (0,0) afterwards (no redundant DMA at l > 0).
                pl.BlockSpec((tk, hdim),
                             lambda l, i, k: (jnp.where(l == 0, k, 0), 0)),
                pl.BlockSpec((tm, hdim), lambda l, i, k: (i, 0)),   # h0 rows f32
                pl.BlockSpec((tm, hdim), lambda l, i, k: (i, 0)),   # lx rows f32
                pl.BlockSpec((None, hdim, hdim),
                             lambda l, i, k: (l, 0, 0)),            # W'_l bf16
                pl.BlockSpec((hdim, cp), lambda l, i, k: (0, 0)),   # W_last bf16
                pl.BlockSpec((1, cp), lambda l, i, k: (0, 0)),      # b_last f32
            ],
            out_specs=pl.BlockSpec(memory_space=pl.ANY),            # manual DMA
            scratch_shapes=[
                pltpu.VMEM((tm, hdim), jnp.float32),        # A_hat @ h acc
                pltpu.VMEM((2 * n_pad, hdim), jnp.bfloat16),  # h double buffer
                pltpu.VMEM((tm, cp), jnp.float32),          # logits tile
                pltpu.SemaphoreType.DMA(()),                # output DMA sem
            ],
        ),
        compiler_params=cparams_layers,
    )(a_hat_bf, x1_bf, x1, lx, wp_stack, wl_pad, bl_pad)

    return out_pad[:n, :ncls]


# ------------------------------ init / graph glue ----------------------------

def init_params(key, num_features, hidden_dim, num_classes, nlayer):
    def linear_init(k, fan_in, fan_out):
        kw, kb = jax.random.split(k)
        bound = 1.0 / jnp.sqrt(float(fan_in))
        w = jax.random.uniform(kw, (fan_in, fan_out), jnp.float32, -bound, bound)
        b = jax.random.uniform(kb, (1, fan_out), jnp.float32, -bound, bound)
        return w, b

    keys = jax.random.split(key, 3 + nlayer)
    params = {
        "conv0": linear_init(keys[0], num_features, hidden_dim),
        "hpconv": linear_init(keys[1], num_features, hidden_dim),
        "conv_last": linear_init(keys[2], hidden_dim, num_classes),
        "gconvs": [],
    }
    bound = 1.0 / jnp.sqrt(float(hidden_dim))
    for li in range(nlayer):
        w = jax.random.uniform(keys[3 + li], (hidden_dim, hidden_dim),
                               jnp.float32, -bound, bound)
        params["gconvs"].append(w)
    return params


def build_graph_mats(key, n_nodes, n_edges):
    """Dense random undirected graph -> (A_s = A+I, deg_s (N,1), A_hat)."""
    k1, k2 = jax.random.split(key)
    src = jax.random.randint(k1, (n_edges,), 0, n_nodes)
    dst = jax.random.randint(k2, (n_edges,), 0, n_nodes)
    adj = jnp.zeros((n_nodes, n_nodes), jnp.float32)
    adj = adj.at[src, dst].set(1.0)
    adj = jnp.maximum(adj, adj.T)                               # undirected
    adj = adj * (1.0 - jnp.eye(n_nodes, dtype=jnp.float32))     # no self loops

    a_self = adj + jnp.eye(n_nodes, dtype=jnp.float32)          # A_s
    deg_s = jnp.sum(a_self, axis=1, keepdims=True)              # (N, 1)

    # gcn_norm adjacency for propagation: D^-1/2 (A + I) D^-1/2
    d_inv_sqrt = 1.0 / jnp.sqrt(jnp.maximum(deg_s, 1e-12))
    a_hat = a_self * d_inv_sqrt * d_inv_sqrt.T
    return a_self, deg_s, a_hat


# ------------------------------ pure-JAX reference ---------------------------

def ref_forward(params, x_raw, a_s, a_hat, deg_s):
    """Mirrors the kernel's bf16 quantization of all MXU operands."""
    f32, bf = jnp.float32, jnp.bfloat16
    q = lambda t: t.astype(bf).astype(f32)
    a_s_q, a_hat_q, x_q = q(a_s), q(a_hat), q(x_raw)

    w0, b0 = params["conv0"]
    whp, bhp = params["hpconv"]
    wl, bl = params["conv_last"]
    hdim = w0.shape[1]

    x1 = jax.nn.relu(x_q @ q(w0) + b0)
    lx_pre = deg_s * x_q - a_s_q @ x_q             # L @ x, L = D_s - A_s
    lx = jax.nn.relu(q(lx_pre) @ q(whp) + bhp)

    eye = jnp.eye(hdim, dtype=f32)
    h = x1
    h0 = x1
    for i, w in enumerate(params["gconvs"]):
        beta = LAMDA / (i + 2)
        agg = a_hat_q @ q(h)
        support = (1.0 - ALPHA) * agg + ALPHA * h0 + GAMMA * lx
        wfold = (1.0 - beta) * eye + beta * w
        h = jax.nn.relu(q(support) @ q(wfold))

    logits = q(h) @ q(wl) + bl
    return jax.nn.log_softmax(logits, axis=1)


# ------------------------------ main ----------------------------------------

if __name__ == "__main__":
    # small synthetic "Planetoid-like" problem (exercises N / feature / class
    # padding: 300 nodes, 100 features, 7 classes)
    N_NODES = 300
    NUM_FEATURES = 100
    HIDDEN_DIM = 128
    NUM_CLASSES = 7
    NLAYER = 3
    N_EDGES = 1200

    root = jax.random.PRNGKey(0)
    k_feat, k_graph, k_params = jax.random.split(root, 3)

    # node features (NormalizeFeatures -> row-normalized nonnegative features)
    x_raw = jax.random.uniform(k_feat, (N_NODES, NUM_FEATURES), jnp.float32)
    x_raw = x_raw / jnp.maximum(jnp.sum(x_raw, axis=1, keepdims=True), 1e-12)

    a_s, deg_s, a_hat = build_graph_mats(k_graph, N_NODES, N_EDGES)
    params = init_params(k_params, NUM_FEATURES, HIDDEN_DIM, NUM_CLASSES, NLAYER)

    out = res_gcn_forward(params, x_raw, a_s, a_hat, deg_s)
    out = jax.block_until_ready(out)

    assert out.shape == (N_NODES, NUM_CLASSES)
    # log_softmax rows should (approximately) exp-sum to 1
    row_sums = jnp.sum(jnp.exp(out), axis=1)
    assert bool(jnp.all(jnp.abs(row_sums - 1.0) < 1e-3))

    # pure-JAX reference check (reference mirrors the bf16 quantization)
    ref = ref_forward(params, x_raw, a_s, a_hat, deg_s)
    max_err = float(jnp.max(jnp.abs(out - ref)))
    assert max_err < 2e-2, f"mismatch vs reference: {max_err}"

    print("KERNEL_OK")
</pallas_src>

<mosaic_0001>
module attributes {stable_mosaic.version = 11 : i64} {
  func.func @prep_kernel(%arg0: i32, %arg1: i32, %arg2: memref<256x256xbf16, #tpu.memory_space<vmem>>, %arg3: memref<256x128xbf16, #tpu.memory_space<vmem>>, %arg4: memref<256x128xbf16, #tpu.memory_space<vmem>>, %arg5: memref<256x1xf32, #tpu.memory_space<vmem>>, %arg6: memref<128x128xbf16, #tpu.memory_space<vmem>>, %arg7: memref<1x128xf32, #tpu.memory_space<vmem>>, %arg8: memref<128x128xbf16, #tpu.memory_space<vmem>>, %arg9: memref<1x128xf32, #tpu.memory_space<vmem>>, %arg10: memref<256x128xf32, #tpu.memory_space<vmem>>, %arg11: memref<256x128xbf16, #tpu.memory_space<vmem>>, %arg12: memref<256x128xf32, #tpu.memory_space<vmem>>, %arg13: memref<256x128xf32, #tpu.memory_space<vmem>>) attributes {dimension_semantics = [#tpu.dimension_semantics<parallel>, #tpu.dimension_semantics<arbitrary>], iteration_bounds = array<i64: 2, 2>, scalar_prefetch = 0 : i64, scratch_operands = 1 : i64, tpu.core_type = #tpu.core_type<tc>, window_params = [{transform_indices = @transform_0, window_bounds = array<i64: 256, 256>}, {transform_indices = @transform_1, window_bounds = array<i64: 256, 128>}, {transform_indices = @transform_2, window_bounds = array<i64: 256, 128>}, {transform_indices = @transform_3, window_bounds = array<i64: 256, 1>}, {pipeline_mode = #tpu.pipeline_mode<synchronous>, transform_indices = @transform_4, window_bounds = array<i64: 128, 128>}, {pipeline_mode = #tpu.pipeline_mode<synchronous>, transform_indices = @transform_5, window_bounds = array<i64: 1, 128>}, {pipeline_mode = #tpu.pipeline_mode<synchronous>, transform_indices = @transform_6, window_bounds = array<i64: 128, 128>}, {pipeline_mode = #tpu.pipeline_mode<synchronous>, transform_indices = @transform_7, window_bounds = array<i64: 1, 128>}, {transform_indices = @transform_8, window_bounds = array<i64: 256, 128>}, {transform_indices = @transform_9, window_bounds = array<i64: 256, 128>}, {transform_indices = @transform_10, window_bounds = array<i64: 256, 128>}]} {
    %c0_i32 = arith.constant 0 : i32
    %0 = arith.cmpi eq, %arg1, %c0_i32 : i32
    %1 = arith.extui %0 : i1 to i32
    %c0_i32_0 = arith.constant 0 : i32
    %2 = arith.cmpi ne, %1, %c0_i32_0 : i32
    scf.if %2 {
      %cst_9 = arith.constant 0.000000e+00 : f32
      %12 = vector.broadcast %cst_9 : f32 to vector<256x128xf32>
      %c0_10 = arith.constant 0 : index
      %c0_11 = arith.constant 0 : index
      %13 = vector.load %arg13[%c0_10, %c0_11] : memref<256x128xf32, #tpu.memory_space<vmem>>, vector<256x128xf32>
      tpu.vector_store %arg13[%c0_10, %c0_11], %12 {strides = array<i32>} : memref<256x128xf32, #tpu.memory_space<vmem>>, vector<256x128xf32>,
    } else {
    }
    %c0 = arith.constant 0 : index
    %c0_1 = arith.constant 0 : index
    %3 = vector.load %arg13[%c0, %c0_1] : memref<256x128xf32, #tpu.memory_space<vmem>>, vector<256x128xf32>
    %c0_2 = arith.constant 0 : index
    %c0_3 = arith.constant 0 : index
    %4 = vector.load %arg2[%c0_2, %c0_3] : memref<256x256xbf16, #tpu.memory_space<vmem>>, vector<256x256xbf16>
    %c0_4 = arith.constant 0 : index
    %c0_5 = arith.constant 0 : index
    %5 = vector.load %arg3[%c0_4, %c0_5] : memref<256x128xbf16, #tpu.memory_space<vmem>>, vector<256x128xbf16>
    %cst = arith.constant dense<0.000000e+00> : vector<256x128xf32>
    %6 = tpu.matmul %4, %5, %cst {dimension_numbers = #tpu.dot_dimension_numbers<[1], [0], [0], [1], [0, 0, 1, 1], [], []>} : vector<256x256xbf16>, vector<256x128xbf16>, vector<256x128xf32> -> vector<256x128xf32>
    %7 = arith.addf %3, %6 : vector<256x128xf32>
    %c0_6 = arith.constant 0 : index
    %c0_7 = arith.constant 0 : index
    %8 = vector.load %arg13[%c0_6, %c0_7] : memref<256x128xf32, #tpu.memory_space<vmem>>, vector<256x128xf32>
    tpu.vector_store %arg13[%c0_6, %c0_7], %7 {strides = array<i32>} : memref<256x128xf32, #tpu.memory_space<vmem>>, vector<256x128xf32>,
    %c1_i32 = arith.constant 1 : i32
    %9 = arith.cmpi eq, %arg1, %c1_i32 : i32
    %10 = arith.extui %9 : i1 to i32
    %c0_i32_8 = arith.constant 0 : i32
    %11 = arith.cmpi ne, %10, %c0_i32_8 : i32
    scf.if %11 {
      %c0_9 = arith.constant 0 : index
      %c0_10 = arith.constant 0 : index
      %12 = vector.load %arg4[%c0_9, %c0_10] : memref<256x128xbf16, #tpu.memory_space<vmem>>, vector<256x128xbf16>
      %c0_11 = arith.constant 0 : index
      %c0_12 = arith.constant 0 : index
      %13 = vector.load %arg6[%c0_11, %c0_12] : memref<128x128xbf16, #tpu.memory_space<vmem>>, vector<128x128xbf16>
      %cst_13 = arith.constant dense<0.000000e+00> : vector<256x128xf32>
      %14 = tpu.matmul %12, %13, %cst_13 {dimension_numbers = #tpu.dot_dimension_numbers<[1], [0], [0], [1], [0, 0, 1, 1], [], []>} : vector<256x128xbf16>, vector<128x128xbf16>, vector<256x128xf32> -> vector<256x128xf32>
      %c0_14 = arith.constant 0 : index
      %c0_15 = arith.constant 0 : index
      %15 = vector.load %arg7[%c0_14, %c0_15] : memref<1x128xf32, #tpu.memory_space<vmem>>, vector<1x128xf32>
      %16 = vector.broadcast %15 : vector<1x128xf32> to vector<256x128xf32>
      %17 = arith.addf %14, %16 : vector<256x128xf32>
      %cst_16 = arith.constant 0.000000e+00 : f32
      %18 = vector.broadcast %cst_16 : f32 to vector<256x128xf32>
      %19 = arith.maximumf %17, %18 : vector<256x128xf32>
      %c0_17 = arith.constant 0 : index
      %c0_18 = arith.constant 0 : index
      %20 = vector.load %arg10[%c0_17, %c0_18] : memref<256x128xf32, #tpu.memory_space<vmem>>, vector<256x128xf32>
      tpu.vector_store %arg10[%c0_17, %c0_18], %19 {strides = array<i32>} : memref<256x128xf32, #tpu.memory_space<vmem>>, vector<256x128xf32>,
      %21 = arith.truncf %19 : vector<256x128xf32> to vector<256x128xbf16>
      %c0_19 = arith.constant 0 : index
      %c0_20 = arith.constant 0 : index
      %22 = vector.load %arg11[%c0_19, %c0_20] : memref<256x128xbf16, #tpu.memory_space<vmem>>, vector<256x128xbf16>
      tpu.vector_store %arg11[%c0_19, %c0_20], %21 {strides = array<i32>} : memref<256x128xbf16, #tpu.memory_space<vmem>>, vector<256x128xbf16>,
      %c0_21 = arith.constant 0 : index
      %c0_22 = arith.constant 0 : index
      %23 = vector.load %arg5[%c0_21, %c0_22] : memref<256x1xf32, #tpu.memory_space<vmem>>, vector<256x1xf32>
      %24 = arith.extf %12 : vector<256x128xbf16> to vector<256x128xf32>
      %25 = vector.broadcast %23 : vector<256x1xf32> to vector<256x128xf32>
      %26 = arith.mulf %25, %24 : vector<256x128xf32>
      %c0_23 = arith.constant 0 : index
      %c0_24 = arith.constant 0 : index
      %27 = vector.load %arg13[%c0_23, %c0_24] : memref<256x128xf32, #tpu.memory_space<vmem>>, vector<256x128xf32>
      %28 = arith.subf %26, %27 : vector<256x128xf32>
      %29 = arith.truncf %28 : vector<256x128xf32> to vector<256x128xbf16>
      %c0_25 = arith.constant 0 : index
      %c0_26 = arith.constant 0 : index
      %30 = vector.load %arg8[%c0_25, %c0_26] : memref<128x128xbf16, #tpu.memory_space<vmem>>, vector<128x128xbf16>
      %cst_27 = arith.constant dense<0.000000e+00> : vector<256x128xf32>
      %31 = tpu.matmul %29, %30, %cst_27 {dimension_numbers = #tpu.dot_dimension_numbers<[1], [0], [0], [1], [0, 0, 1, 1], [], []>} : vector<256x128xbf16>, vector<128x128xbf16>, vector<256x128xf32> -> vector<256x128xf32>
      %c0_28 = arith.constant 0 : index
      %c0_29 = arith.constant 0 : index
      %32 = vector.load %arg9[%c0_28, %c0_29] : memref<1x128xf32, #tpu.memory_space<vmem>>, vector<1x128xf32>
      %33 = vector.broadcast %32 : vector<1x128xf32> to vector<256x128xf32>
      %34 = arith.addf %31, %33 : vector<256x128xf32>
      %cst_30 = arith.constant 0.000000e+00 : f32
      %35 = vector.broadcast %cst_30 : f32 to vector<256x128xf32>
      %36 = arith.maximumf %34, %35 : vector<256x128xf32>
      %c0_31 = arith.constant 0 : index
      %c0_32 = arith.constant 0 : index
      %37 = vector.load %arg12[%c0_31, %c0_32] : memref<256x128xf32, #tpu.memory_space<vmem>>, vector<256x128xf32>
      tpu.vector_store %arg12[%c0_31, %c0_32], %36 {strides = array<i32>} : memref<256x128xf32, #tpu.memory_space<vmem>>, vector<256x128xf32>,
    } else {
    }
    return
  }
  func.func @transform_0(%arg0: i32, %arg1: i32) -> (i32, i32) {
    %c0_i32 = arith.constant 0 : i32
    return %arg0, %arg1 : i32, i32
  }
  func.func @transform_1(%arg0: i32, %arg1: i32) -> (i32, i32) {
    %c0_i32 = arith.constant 0 : i32
    %c0_i32_0 = arith.constant 0 : i32
    return %arg1, %c0_i32 : i32, i32
  }
  func.func @transform_2(%arg0: i32, %arg1: i32) -> (i32, i32) {
    %c0_i32 = arith.constant 0 : i32
    %c0_i32_0 = arith.constant 0 : i32
    return %arg0, %c0_i32 : i32, i32
  }
  func.func @transform_3(%arg0: i32, %arg1: i32) -> (i32, i32) {
    %c0_i32 = arith.constant 0 : i32
    %c0_i32_0 = arith.constant 0 : i32
    return %arg0, %c0_i32 : i32, i32
  }
  func.func @transform_4(%arg0: i32, %arg1: i32) -> (i32, i32) {
    %c0_i32 = arith.constant 0 : i32
    %c0_i32_0 = arith.constant 0 : i32
    %c0_i32_1 = arith.constant 0 : i32
    return %c0_i32, %c0_i32_0 : i32, i32
  }
  func.func @transform_5(%arg0: i32, %arg1: i32) -> (i32, i32) {
    %c0_i32 = arith.constant 0 : i32
    %c0_i32_0 = arith.constant 0 : i32
    %c0_i32_1 = arith.constant 0 : i32
    return %c0_i32, %c0_i32_0 : i32, i32
  }
  func.func @transform_6(%arg0: i32, %arg1: i32) -> (i32, i32) {
    %c0_i32 = arith.constant 0 : i32
    %c0_i32_0 = arith.constant 0 : i32
    %c0_i32_1 = arith.constant 0 : i32
    return %c0_i32, %c0_i32_0 : i32, i32
  }
  func.func @transform_7(%arg0: i32, %arg1: i32) -> (i32, i32) {
    %c0_i32 = arith.constant 0 : i32
    %c0_i32_0 = arith.constant 0 : i32
    %c0_i32_1 = arith.constant 0 : i32
    return %c0_i32, %c0_i32_0 : i32, i32
  }
  func.func @transform_8(%arg0: i32, %arg1: i32) -> (i32, i32) {
    %c0_i32 = arith.constant 0 : i32
    %c0_i32_0 = arith.constant 0 : i32
    return %arg0, %c0_i32 : i32, i32
  }
  func.func @transform_9(%arg0: i32, %arg1: i32) -> (i32, i32) {
    %c0_i32 = arith.constant 0 : i32
    %c0_i32_0 = arith.constant 0 : i32
    return %arg0, %c0_i32 : i32, i32
  }
  func.func @transform_10(%arg0: i32, %arg1: i32) -> (i32, i32) {
    %c0_i32 = arith.constant 0 : i32
    %c0_i32_0 = arith.constant 0 : i32
    return %arg0, %c0_i32 : i32, i32
  }
}

</mosaic_0001>

<llo_original>
// kernel: tpu_custom_call.1
$region0: #{tpu_custom_call.1}
  #allocation0 [shape = 'u32[]', space=smem, size = 0x4, offset = 0x4, fixed_abs, tag = 'smem constant byte address 0x4 - core index']
  #allocation1 [shape = 'u32[144,128]{1,0:T(1,128)}', space=vmem, size = 0x12000, scoped, tag = 'internal scratch']
  #allocation2 [shape = 'f32[256,128]{1,0:T(8,128)}', space=vmem, size = 0x20000, scoped, tag = 'scratch operand']
  %s0 = inlined_call_operand.hbm [shape: bf16[512,512], index: 0, kind: input, shape index: {}]
  %s1 = inlined_call_operand.vmem [shape: bf16[512,128], index: 1, kind: input, shape index: {}]
  %s2 = inlined_call_operand.vmem [shape: bf16[512,128], index: 2, kind: input, shape index: {}]
  %s3 = inlined_call_operand.vmem [shape: f32[512,1], index: 3, kind: input, shape index: {}]
  %s4 = inlined_call_operand.hbm [shape: bf16[128,128], index: 4, kind: input, shape index: {}]
  %s5 = inlined_call_operand.vmem [shape: f32[1,128], index: 5, kind: input, shape index: {}]
  %s6 = inlined_call_operand.hbm [shape: bf16[128,128], index: 6, kind: input, shape index: {}]
  %s7 = inlined_call_operand.vmem [shape: f32[1,128], index: 7, kind: input, shape index: {}]
  %s8 = inlined_call_operand.hbm [shape: f32[512,128], index: 8, kind: output, shape index: {0}]
  %s9 = inlined_call_operand.hbm [shape: bf16[512,128], index: 9, kind: output, shape index: {1}]
  %s10 = inlined_call_operand.hbm [shape: f32[512,128], index: 10, kind: output, shape index: {2}]
  %11 = xla_tuple %s8, %s9, %s10
  %s12 = sld [smem:[#allocation0]]
  $region101: #{tpu_custom_call.1} parent=0
    _
  %s14 = ssub.s32 1, %s12
  %s15 = scalar_select 0, %s14, %s12
  $region1: #{tpu_custom_call.1} parent=0
    #allocation3 [shape = 'u8[262144]{0}', space=vmem, size = 0x40000, scoped, tag = 'input window, operand 0']
    #allocation4 [shape = 's32[2]{0}', space=sflag, size = 0x8, scoped, tag = 'scoped memory for tpu_custom_call.1']
    #allocation5 [shape = 's32[2]{0}', space=sflag, size = 0x8, scoped, tag = 'scoped memory for tpu_custom_call.1']
    #allocation6 [shape = 'u8[32768]{0}', space=vmem, size = 0x8000, scoped, tag = 'input window, operand 4, single buffered']
    #allocation7 [shape = 's32[1]{0}', space=sflag, size = 0x4, scoped, tag = 'scoped memory for tpu_custom_call.1']
    #allocation8 [shape = 'u8[32768]{0}', space=vmem, size = 0x8000, scoped, tag = 'input window, operand 6, single buffered']
    #allocation9 [shape = 'u8[262144]{0}', space=vmem, size = 0x40000, scoped, tag = 'output window, operand 0']
    #allocation10 [shape = 'u8[131072]{0}', space=vmem, size = 0x20000, scoped, tag = 'output window, operand 1']
    #allocation11 [shape = 's32[2]{0}', space=sflag, size = 0x8, scoped, tag = 'scoped memory for tpu_custom_call.1']
    #allocation12 [shape = 'u8[262144]{0}', space=vmem, size = 0x40000, scoped, tag = 'output window, operand 2']
    %16 = vsyncpa [#allocation4], 0
    %s17 = scalar_lea.sflag [#allocation4], 1
    %18 = vsyncpa %s17, 0
    %19 = vsyncpa [#allocation7], 0
    %20 = vsyncpa [#allocation5], 0
    %s21 = scalar_lea.sflag [#allocation5], 1
    %22 = vsyncpa %s21, 0
    %23 = vsyncpa [#allocation11], 0
    %s24 = scalar_lea.sflag [#allocation11], 1
    %25 = vsyncpa %s24, 0
    loop: start=0, step=1, limit=6
    $region2: #{tpu_custom_call.1} parent=1 // loop_pre_header
      _
    $region3: #{tpu_custom_call.1} parent=1 // loop_header
      %s27 = sphi 0, %s31
      %p28 = scmp.ge.s32.totalorder %s27, 6
      %s34 = sphi 0, %s46
      %s35 = sphi 0, %s42
      %s36 = sphi 0, %s34
      %s37 = sphi 0, %s35
      %s38 = sphi 0, %s36
      %s39 = sphi 0, %s37
      %s51 = sphi 0, %s53
      %s54 = sphi 0, %s51
      %s55 = sphi 0, %s54
      %s71 = sphi 0, %s55
      %s77 = sphi 0, %s79
      %s80 = sphi 0, %s77
      %s81 = sphi 0, %s80
      %s97 = sphi 0, %s81
      %s103 = sphi 0, %s105
      %s106 = sphi 0, %s103
      %s107 = sphi 0, %s106
      %s123 = sphi 0, %s107
      %s129 = sphi 0, %s131
      %s132 = sphi 0, %s129
      %s133 = sphi 0, %s132
      %s149 = sphi 0, %s133
      %s153 = sphi 0, %s153
      %s155 = sphi 0, %s153
      %s156 = sphi 0, %s155
      %s170 = sphi 0, %s156
      %s174 = sphi 0, %s174
      %s176 = sphi 0, %s174
      %s177 = sphi 0, %s176
      %s191 = sphi 0, %s177
      %s195 = sphi 0, %s195
      %s197 = sphi 0, %s195
      %s198 = sphi 0, %s197
      %s212 = sphi 0, %s198
      %s216 = sphi 0, %s216
      %s218 = sphi 0, %s216
      %s219 = sphi 0, %s218
      %s233 = sphi 0, %s219
      %s239 = sphi 0, %s241
      %s242 = sphi 0, %s239
      %s243 = sphi 0, %s242
      %s259 = sphi 0, %s243
      %s265 = sphi 0, %s267
      %s268 = sphi 0, %s265
      %s269 = sphi 0, %s268
      %s285 = sphi 0, %s269
      %s291 = sphi 0, %s293
      %s294 = sphi 0, %s291
      %s295 = sphi 0, %s294
      %s311 = sphi 0, %s295
    $region4: #{tpu_custom_call.1} parent=1 // loop_header_branch
      %30 = sbr.rel (%p28) target = $region8
    $region5: #{tpu_custom_call.1} parent=1 // loop_body
      %s32 = ssub.s32 %s27, 1
      %s33 = ssub.s32 %s27, 2
      %s40 = sadd.s32 1, %s35
      %p41 = scmp.ge.s32.totalorder %s40, 2
      %s42 = scalar_select %p41, 0, %s40
      %s43 = sadd.s32 1, %s34
      %s44 = scalar_select %p41, %s43, %s34
      %p45 = scmp.ge.s32.totalorder %s44, 2
      %s46 = scalar_select %p45, 0, %s44
      %s47 = ssub.s32 %s34, %s46
      %s48 = ssub.s32 %s35, %s42
      %s49 = sor.u32 %s47, %s48
      %p50 = scmp.eq.s32.totalorder %s49, 0
      %s52 = sadd.s32 %s51, 1
      %s53 = scalar_select %p50, %s51, %s52
      %p56 = pneg %p50
      %p57 = scmp.eq.s32.totalorder %s27, 3
      %p58 = por %p56, %p57
      %p59 = scmp.ne.s32.totalorder %s51, %s54
      %p60 = scmp.eq.s32.totalorder %s27, 0
      %p61 = por %p59, %p60
      %p62 = scmp.ne.s32.totalorder %s51, %s54
      %p63 = scmp.eq.s32.totalorder %s32, 3
      %p64 = por %p62, %p63
      %p65 = scmp.ne.s32.totalorder %s54, %s55
      %p66 = scmp.eq.s32.totalorder %s32, 0
      %p67 = por %p65, %p66
      %p68 = scmp.ne.s32.totalorder %s54, %s55
      %p69 = scmp.eq.s32.totalorder %s33, 3
      %p70 = por %p68, %p69
      %p72 = scmp.ne.s32.totalorder %s55, %s71
      %p73 = scmp.eq.s32.totalorder %s33, 0
      %p74 = por %p72, %p73
      %s75 = ssub.s32 %s35, %s42
      %p76 = scmp.eq.s32.totalorder %s75, 0
      %s78 = sadd.s32 %s77, 1
      %s79 = scalar_select %p76, %s77, %s78
      %p82 = pneg %p76
      %p83 = scmp.eq.s32.totalorder %s27, 3
      %p84 = por %p82, %p83
      %p85 = scmp.ne.s32.totalorder %s77, %s80
      %p86 = scmp.eq.s32.totalorder %s27, 0
      %p87 = por %p85, %p86
      %p88 = scmp.ne.s32.totalorder %s77, %s80
      %p89 = scmp.eq.s32.totalorder %s32, 3
      %p90 = por %p88, %p89
      %p91 = scmp.ne.s32.totalorder %s80, %s81
      %p92 = scmp.eq.s32.totalorder %s32, 0
      %p93 = por %p91, %p92
      %p94 = scmp.ne.s32.totalorder %s80, %s81
      %p95 = scmp.eq.s32.totalorder %s33, 3
      %p96 = por %p94, %p95
      %p98 = scmp.ne.s32.totalorder %s81, %s97
      %p99 = scmp.eq.s32.totalorder %s33, 0
      %p100 = por %p98, %p99
      %s101 = ssub.s32 %s34, %s46
      %p102 = scmp.eq.s32.totalorder %s101, 0
      %s104 = sadd.s32 %s103, 1
      %s105 = scalar_select %p102, %s103, %s104
      %p108 = pneg %p102
      %p109 = scmp.eq.s32.totalorder %s27, 3
      %p110 = por %p108, %p109
      %p111 = scmp.ne.s32.totalorder %s103, %s106
      %p112 = scmp.eq.s32.totalorder %s27, 0
      %p113 = por %p111, %p112
      %p114 = scmp.ne.s32.totalorder %s103, %s106
      %p115 = scmp.eq.s32.totalorder %s32, 3
      %p116 = por %p114, %p115
      %p117 = scmp.ne.s32.totalorder %s106, %s107
      %p118 = scmp.eq.s32.totalorder %s32, 0
      %p119 = por %p117, %p118
      %p120 = scmp.ne.s32.totalorder %s106, %s107
      %p121 = scmp.eq.s32.totalorder %s33, 3
      %p122 = por %p120, %p121
      %p124 = scmp.ne.s32.totalorder %s107, %s123
      %p125 = scmp.eq.s32.totalorder %s33, 0
      %p126 = por %p124, %p125
      %s127 = ssub.s32 %s34, %s46
      %p128 = scmp.eq.s32.totalorder %s127, 0
      %s130 = sadd.s32 %s129, 1
      %s131 = scalar_select %p128, %s129, %s130
      %p134 = pneg %p128
      %p135 = scmp.eq.s32.totalorder %s27, 3
      %p136 = por %p134, %p135
      %p137 = scmp.ne.s32.totalorder %s129, %s132
      %p138 = scmp.eq.s32.totalorder %s27, 0
      %p139 = por %p137, %p138
      %p140 = scmp.ne.s32.totalorder %s129, %s132
      %p141 = scmp.eq.s32.totalorder %s32, 3
      %p142 = por %p140, %p141
      %p143 = scmp.ne.s32.totalorder %s132, %s133
      %p144 = scmp.eq.s32.totalorder %s32, 0
      %p145 = por %p143, %p144
      %p146 = scmp.ne.s32.totalorder %s132, %s133
      %p147 = scmp.eq.s32.totalorder %s33, 3
      %p148 = por %p146, %p147
      %p150 = scmp.ne.s32.totalorder %s133, %s149
      %p151 = scmp.eq.s32.totalorder %s33, 0
      %p152 = por %p150, %p151
      %s154 = sadd.s32 %s153, 1
      %p157 = scmp.eq.s32.totalorder %s27, 3
      %p158 = scmp.ne.s32.totalorder %s153, %s155
      %p159 = scmp.eq.s32.totalorder %s27, 0
      %p160 = por %p158, %p159
      %p161 = scmp.ne.s32.totalorder %s153, %s155
      %p162 = scmp.eq.s32.totalorder %s32, 3
      %p163 = por %p161, %p162
      %p164 = scmp.ne.s32.totalorder %s155, %s156
      %p165 = scmp.eq.s32.totalorder %s32, 0
      %p166 = por %p164, %p165
      %p167 = scmp.ne.s32.totalorder %s155, %s156
      %p168 = scmp.eq.s32.totalorder %s33, 3
      %p169 = por %p167, %p168
      %p171 = scmp.ne.s32.totalorder %s156, %s170
      %p172 = scmp.eq.s32.totalorder %s33, 0
      %p173 = por %p171, %p172
      %s175 = sadd.s32 %s174, 1
      %p178 = scmp.eq.s32.totalorder %s27, 3
      %p179 = scmp.ne.s32.totalorder %s174, %s176
      %p180 = scmp.eq.s32.totalorder %s27, 0
      %p181 = por %p179, %p180
      %p182 = scmp.ne.s32.totalorder %s174, %s176
      %p183 = scmp.eq.s32.totalorder %s32, 3
      %p184 = por %p182, %p183
      %p185 = scmp.ne.s32.totalorder %s176, %s177
      %p186 = scmp.eq.s32.totalorder %s32, 0
      %p187 = por %p185, %p186
      %p188 = scmp.ne.s32.totalorder %s176, %s177
      %p189 = scmp.eq.s32.totalorder %s33, 3
      %p190 = por %p188, %p189
      %p192 = scmp.ne.s32.totalorder %s177, %s191
      %p193 = scmp.eq.s32.totalorder %s33, 0
      %p194 = por %p192, %p193
      %s196 = sadd.s32 %s195, 1
      %p199 = scmp.eq.s32.totalorder %s27, 3
      %p200 = scmp.ne.s32.totalorder %s195, %s197
      %p201 = scmp.eq.s32.totalorder %s27, 0
      %p202 = por %p200, %p201
      %p203 = scmp.ne.s32.totalorder %s195, %s197
      %p204 = scmp.eq.s32.totalorder %s32, 3
      %p205 = por %p203, %p204
      %p206 = scmp.ne.s32.totalorder %s197, %s198
      %p207 = scmp.eq.s32.totalorder %s32, 0
      %p208 = por %p206, %p207
      %p209 = scmp.ne.s32.totalorder %s197, %s198
      %p210 = scmp.eq.s32.totalorder %s33, 3
      %p211 = por %p209, %p210
      %p213 = scmp.ne.s32.totalorder %s198, %s212
      %p214 = scmp.eq.s32.totalorder %s33, 0
      %p215 = por %p213, %p214
      %s217 = sadd.s32 %s216, 1
      %p220 = scmp.eq.s32.totalorder %s27, 3
      %p221 = scmp.ne.s32.totalorder %s216, %s218
      %p222 = scmp.eq.s32.totalorder %s27, 0
      %p223 = por %p221, %p222
      %p224 = scmp.ne.s32.totalorder %s216, %s218
      %p225 = scmp.eq.s32.totalorder %s32, 3
      %p226 = por %p224, %p225
      %p227 = scmp.ne.s32.totalorder %s218, %s219
      %p228 = scmp.eq.s32.totalorder %s32, 0
      %p229 = por %p227, %p228
      %p230 = scmp.ne.s32.totalorder %s218, %s219
      %p231 = scmp.eq.s32.totalorder %s33, 3
      %p232 = por %p230, %p231
      %p234 = scmp.ne.s32.totalorder %s219, %s233
      %p235 = scmp.eq.s32.totalorder %s33, 0
      %p236 = por %p234, %p235
      %s237 = ssub.s32 %s34, %s46
      %p238 = scmp.eq.s32.totalorder %s237, 0
      %s240 = sadd.s32 %s239, 1
      %s241 = scalar_select %p238, %s239, %s240
      %p244 = pneg %p238
      %p245 = scmp.eq.s32.totalorder %s27, 3
      %p246 = por %p244, %p245
      %p247 = scmp.ne.s32.totalorder %s239, %s242
      %p248 = scmp.eq.s32.totalorder %s27, 0
      %p249 = por %p247, %p248
      %p250 = scmp.ne.s32.totalorder %s239, %s242
      %p251 = scmp.eq.s32.totalorder %s32, 3
      %p252 = por %p250, %p251
      %p253 = scmp.ne.s32.totalorder %s242, %s243
      %p254 = scmp.eq.s32.totalorder %s32, 0
      %p255 = por %p253, %p254
      %p256 = scmp.ne.s32.totalorder %s242, %s243
      %p257 = scmp.eq.s32.totalorder %s33, 3
      %p258 = por %p256, %p257
      %p260 = scmp.ne.s32.totalorder %s243, %s259
      %p261 = scmp.eq.s32.totalorder %s33, 0
      %p262 = por %p260, %p261
      %s263 = ssub.s32 %s34, %s46
      %p264 = scmp.eq.s32.totalorder %s263, 0
      %s266 = sadd.s32 %s265, 1
      %s267 = scalar_select %p264, %s265, %s266
      %p270 = pneg %p264
      %p271 = scmp.eq.s32.totalorder %s27, 3
      %p272 = por %p270, %p271
      %p273 = scmp.ne.s32.totalorder %s265, %s268
      %p274 = scmp.eq.s32.totalorder %s27, 0
      %p275 = por %p273, %p274
      %p276 = scmp.ne.s32.totalorder %s265, %s268
      %p277 = scmp.eq.s32.totalorder %s32, 3
      %p278 = por %p276, %p277
      %p279 = scmp.ne.s32.totalorder %s268, %s269
      %p280 = scmp.eq.s32.totalorder %s32, 0
      %p281 = por %p279, %p280
      %p282 = scmp.ne.s32.totalorder %s268, %s269
      %p283 = scmp.eq.s32.totalorder %s33, 3
      %p284 = por %p282, %p283
      %p286 = scmp.ne.s32.totalorder %s269, %s285
      %p287 = scmp.eq.s32.totalorder %s33, 0
      %p288 = por %p286, %p287
      %s289 = ssub.s32 %s34, %s46
      %p290 = scmp.eq.s32.totalorder %s289, 0
      %s292 = sadd.s32 %s291, 1
      %s293 = scalar_select %p290, %s291, %s292
      %p296 = pneg %p290
      %p297 = scmp.eq.s32.totalorder %s27, 3
      %p298 = por %p296, %p297
      %p299 = scmp.ne.s32.totalorder %s291, %s294
      %p300 = scmp.eq.s32.totalorder %s27, 0
      %p301 = por %p299, %p300
      %p302 = scmp.ne.s32.totalorder %s291, %s294
      %p303 = scmp.eq.s32.totalorder %s32, 3
      %p304 = por %p302, %p303
      %p305 = scmp.ne.s32.totalorder %s294, %s295
      %p306 = scmp.eq.s32.totalorder %s32, 0
      %p307 = por %p305, %p306
      %p308 = scmp.ne.s32.totalorder %s294, %s295
      %p309 = scmp.eq.s32.totalorder %s33, 3
      %p310 = por %p308, %p309
      %p312 = scmp.ne.s32.totalorder %s295, %s311
      %p313 = scmp.eq.s32.totalorder %s33, 0
      %p314 = por %p312, %p313
      %p315 = scmp.le.s32.totalorder 1, %s27
      %p316 = scmp.lt.s32.totalorder %s27, 5
      %p317 = pnand %p315, %p316
      %p318 = pneg %p317
      // Predicated region
      $region9: #{tpu_custom_call.1} parent=5 // pred_check
        _
      $region10: #{tpu_custom_call.1} parent=5 // pred_check_branch
        %320 = sbr.rel (%p317) target = $region12
      $region11: #{tpu_custom_call.1} parent=5 // pred_region
        %s321 = ssub.s32 %s27, 1
        // Predicated region
        $region13: #{tpu_custom_call.1} parent=11 // pred_check
          %p322 = pneg %p166
        $region14: #{tpu_custom_call.1} parent=11 // pred_check_branch
          %324 = sbr.rel (%p322) target = $region16
        $region15: #{tpu_custom_call.1} parent=11 // pred_region
          %s326 = ssub.s32 1024, 1024
          %327 = vsyncadd [#allocation7], %s326
          %s328 = sshll.u32 [#allocation6], 4
          %s329 = int_to_ptr.vmem [resolvable:$true] %s328
          %334 = dma.hbm_to_vmem [thread:$0]  %s4, 1024, %s329, [#allocation7], 64, 64, 4
        $region16: #{tpu_custom_call.1} parent=11 // pred_fallthru
          _
        // Predicated region
        $region17: #{tpu_custom_call.1} parent=11 // pred_check
          %p335 = pneg %p187
        $region18: #{tpu_custom_call.1} parent=11 // pred_check_branch
          %337 = sbr.rel (%p335) target = $region20
        $region19: #{tpu_custom_call.1} parent=11 // pred_region
          _
        $region20: #{tpu_custom_call.1} parent=11 // pred_fallthru
          _
        // Predicated region
        $region21: #{tpu_custom_call.1} parent=11 // pred_check
          %p338 = pneg %p208
        $region22: #{tpu_custom_call.1} parent=11 // pred_check_branch
          %340 = sbr.rel (%p338) target = $region24
        $region23: #{tpu_custom_call.1} parent=11 // pred_region
          %s342 = ssub.s32 1024, 1024
          %343 = vsyncadd [#allocation7], %s342
          %s344 = sshll.u32 [#allocation8], 4
          %s345 = int_to_ptr.vmem [resolvable:$true] %s344
          %350 = dma.hbm_to_vmem [thread:$0]  %s6, 1024, %s345, [#allocation7], 64, 64, 4
        $region24: #{tpu_custom_call.1} parent=11 // pred_fallthru
          _
        // Predicated region
        $region25: #{tpu_custom_call.1} parent=11 // pred_check
          %p351 = pneg %p229
        $region26: #{tpu_custom_call.1} parent=11 // pred_check_branch
          %353 = sbr.rel (%p351) target = $region28
        $region27: #{tpu_custom_call.1} parent=11 // pred_region
          _
        $region28: #{tpu_custom_call.1} parent=11 // pred_fallthru
          _
      $region12: #{tpu_custom_call.1} parent=5 // pred_fallthru
        _
      %p354 = scmp.lt.s32.totalorder %s27, 4
      // Predicated region
      $region29: #{tpu_custom_call.1} parent=5 // pred_check
        %p355 = pneg %p354
      $region30: #{tpu_custom_call.1} parent=5 // pred_check_branch
        %357 = sbr.rel (%p355) target = $region32
      $region31: #{tpu_custom_call.1} parent=5 // pred_region
        // Predicated region
        $region33: #{tpu_custom_call.1} parent=31 // pred_check
          %p358 = pneg %p61
        $region34: #{tpu_custom_call.1} parent=31 // pred_check_branch
          %360 = sbr.rel (%p358) target = $region36
        $region35: #{tpu_custom_call.1} parent=31 // pred_region
          %s361 = sand.u32 %s51, 1
          %s362 = scalar_lea.sflag [#allocation4], %s361
          %s363 = sand.u32 %s51, 1
          %s364 = smul.addr %s363, 256
          %s365 = scalar_lea.vmem [#allocation3], %s364
          %s366 = smul.u32 32, %s34
          %s367 = smul.u32 2, %s35
          %s369 = ssub.s32 4096, 4096
          %370 = vsyncadd %s362, %s369
          %s371 = smul.addr %s366, 4
          %s372 = sadd.s32 %s367, %s371
          %s373 = smul.addr %s372, 64
          %s374 = scalar_lea.hbm %s0, %s373
          %s375 = sshll.u32 %s365, 4
          %s376 = int_to_ptr.vmem [resolvable:$true] %s375
          %381 = dma.hbm_to_vmem [thread:$0]  %s374, 4096, %s376, %s362, 256, 128, 8
        $region36: #{tpu_custom_call.1} parent=31 // pred_fallthru
          _
        // Predicated region
        $region37: #{tpu_custom_call.1} parent=31 // pred_check
          %p382 = pneg %p87
        $region38: #{tpu_custom_call.1} parent=31 // pred_check_branch
          %384 = sbr.rel (%p382) target = $region40
        $region39: #{tpu_custom_call.1} parent=31 // pred_region
          %s385 = smul.u32 32, %s35
          %p386 = scmp.lt.s32.totalorder %s385, 63
          %s387 = scalar_select %p386, %s385, 63
          %s388 = smul.addr %s387, 4
          %s389 = scalar_lea.vmem %s1, %s388
          %s390 = smul.u32 32, %s35
        $region40: #{tpu_custom_call.1} parent=31 // pred_fallthru
          _
        // Predicated region
        $region41: #{tpu_custom_call.1} parent=31 // pred_check
          %p391 = pneg %p113
        $region42: #{tpu_custom_call.1} parent=31 // pred_check_branch
          %393 = sbr.rel (%p391) target = $region44
        $region43: #{tpu_custom_call.1} parent=31 // pred_region
          %s394 = smul.u32 32, %s34
          %p395 = scmp.lt.s32.totalorder %s394, 63
          %s396 = scalar_select %p395, %s394, 63
          %s397 = smul.addr %s396, 4
          %s398 = scalar_lea.vmem %s2, %s397
          %s399 = smul.u32 32, %s34
        $region44: #{tpu_custom_call.1} parent=31 // pred_fallthru
          _
        // Predicated region
        $region45: #{tpu_custom_call.1} parent=31 // pred_check
          %p400 = pneg %p139
        $region46: #{tpu_custom_call.1} parent=31 // pred_check_branch
          %402 = sbr.rel (%p400) target = $region48
        $region47: #{tpu_custom_call.1} parent=31 // pred_region
          %s403 = smul.u32 32, %s34
          %p404 = scmp.lt.s32.totalorder %s403, 63
          %s405 = scalar_select %p404, %s403, 63
          %s406 = smul.addr %s405, 8
          %s407 = scalar_lea.vmem %s3, %s406
          %s408 = smul.u32 32, %s34
        $region48: #{tpu_custom_call.1} parent=31 // pred_fallthru
          _
      $region32: #{tpu_custom_call.1} parent=5 // pred_fallthru
        _
      %p409 = scmp.le.s32.totalorder 1, %s27
      %p410 = scmp.lt.s32.totalorder %s27, 5
      %p411 = pnand %p409, %p410
      %p412 = pneg %p411
      // Predicated region
      $region49: #{tpu_custom_call.1} parent=5 // pred_check
        _
      $region50: #{tpu_custom_call.1} parent=5 // pred_check_branch
        %414 = sbr.rel (%p411) target = $region52
      $region51: #{tpu_custom_call.1} parent=5 // pred_region
        %s415 = ssub.s32 %s27, 1
        %s416 = sand.u32 %s54, 1
        %s417 = scalar_lea.sflag [#allocation4], %s416
        %s418 = sand.u32 %s54, 1
        %s419 = smul.addr %s418, 256
        %s420 = scalar_lea.vmem [#allocation3], %s419
        // Predicated region
        $region53: #{tpu_custom_call.1} parent=51 // pred_check
          %p421 = pneg %p67
        $region54: #{tpu_custom_call.1} parent=51 // pred_check_branch
          %423 = sbr.rel (%p421) target = $region56
        $region55: #{tpu_custom_call.1} parent=51 // pred_region
          %424 = dma.done %s417, 4096
        $region56: #{tpu_custom_call.1} parent=51 // pred_fallthru
          _
        // Predicated region
        $region57: #{tpu_custom_call.1} parent=51 // pred_check
          %p425 = pneg %p166
        $region58: #{tpu_custom_call.1} parent=51 // pred_check_branch
          %427 = sbr.rel (%p425) target = $region60
        $region59: #{tpu_custom_call.1} parent=51 // pred_region
          %428 = dma.done [#allocation7], 1024
        $region60: #{tpu_custom_call.1} parent=51 // pred_fallthru
          _
        // Predicated region
        $region61: #{tpu_custom_call.1} parent=51 // pred_check
          %p429 = pneg %p208
        $region62: #{tpu_custom_call.1} parent=51 // pred_check_branch
          %431 = sbr.rel (%p429) target = $region64
        $region63: #{tpu_custom_call.1} parent=51 // pred_region
          %432 = dma.done [#allocation7], 1024
        $region64: #{tpu_custom_call.1} parent=51 // pred_fallthru
          _
        %s433 = sand.u32 %s54, 1
        %s434 = scalar_lea.sflag [#allocation4], %s433
        %s435 = sand.u32 %s54, 1
        %s436 = smul.addr %s435, 256
        %s437 = scalar_lea.vmem [#allocation3], %s436
        %p438 = pneg %p67
        %p439 = pneg %p64
        %s440 = smul.u32 32, %s37
        %p441 = scmp.lt.s32.totalorder %s440, 63
        %s442 = scalar_select %p441, %s440, 63
        %s443 = smul.addr %s442, 4
        %s444 = scalar_lea.vmem %s1, %s443
        %p445 = pneg %p93
        %p446 = pneg %p90
        %s447 = smul.u32 32, %s36
        %p448 = scmp.lt.s32.totalorder %s447, 63
        %s449 = scalar_select %p448, %s447, 63
        %s450 = smul.addr %s449, 4
        %s451 = scalar_lea.vmem %s2, %s450
        %p452 = pneg %p119
        %p453 = pneg %p116
        %s454 = smul.u32 32, %s36
        %p455 = scmp.lt.s32.totalorder %s454, 63
        %s456 = scalar_select %p455, %s454, 63
        %s457 = smul.addr %s456, 8
        %s458 = scalar_lea.vmem %s3, %s457
        %p459 = pneg %p145
        %p460 = pneg %p142
        %p461 = pneg %p166
        %p462 = pneg %p163
        %p463 = pneg %p187
        %p464 = pneg %p184
        %p465 = pneg %p208
        %p466 = pneg %p205
        %p467 = pneg %p229
        %p468 = pneg %p226
        %p469 = pneg %p255
        %p470 = pneg %p252
        %s471 = sand.u32 %s242, 1
        %s472 = scalar_lea.sflag [#allocation5], %s471
        %s473 = sand.u32 %s242, 1
        %s474 = smul.addr %s473, 256
        %s475 = scalar_lea.vmem [#allocation9], %s474
        %p476 = pneg %p281
        %p477 = pneg %p278
        %s478 = sand.u32 %s32, 1
        %s479 = scalar_lea.sflag [#allocation11], %s478
        %s480 = sand.u32 %s268, 1
        %s481 = smul.addr %s480, 128
        %s482 = scalar_lea.vmem [#allocation10], %s481
        %p483 = pneg %p307
        %p484 = pneg %p304
        %s485 = sand.u32 %s32, 1
        %s486 = scalar_lea.sflag [#allocation11], %s485
        %s487 = sand.u32 %s294, 1
        %s488 = smul.addr %s487, 256
        %s489 = scalar_lea.vmem [#allocation12], %s488
        %s490 = smul.u32 32, %s36
        %s491 = smul.u32 2, %s37
        %s492 = smul.u32 32, %s37
        %p493 = scmp.lt.s32.totalorder %s492, 63
        %s494 = scalar_select %p493, %s492, 63
        %s495 = smul.addr %s494, 4
        %s496 = scalar_lea.vmem %s1, %s495
        %s497 = smul.u32 32, %s37
        %s498 = smul.u32 32, %s36
        %p499 = scmp.lt.s32.totalorder %s498, 63
        %s500 = scalar_select %p499, %s498, 63
        %s501 = smul.addr %s500, 4
        %s502 = scalar_lea.vmem %s2, %s501
        %s503 = smul.u32 32, %s36
        %s504 = smul.u32 32, %s36
        %p505 = scmp.lt.s32.totalorder %s504, 63
        %s506 = scalar_select %p505, %s504, 63
        %s507 = smul.addr %s506, 8
        %s508 = scalar_lea.vmem %s3, %s507
        %s509 = smul.u32 32, %s36
        %s510 = smul.u32 32, %s36
        %s511 = smul.u32 32, %s36
        %s512 = smul.u32 32, %s36
        %p514 = scmp.eq.s32.totalorder %s37, 0
        // Predicated region
        $region65: #{tpu_custom_call.1} parent=51 // pred_check
          %p515 = pneg %p514
        $region66: #{tpu_custom_call.1} parent=51 // pred_check_branch
          %517 = sbr.rel (%p515) target = $region68
        $region67: #{tpu_custom_call.1} parent=51 // pred_region
          %518 = vst [vmem:[#allocation2] sm:$0xff] 0.0
          %519 = vst [vmem:[#allocation2 + $0x8] sm:$0xff] 0.0
          %520 = vst [vmem:[#allocation2 + $0x10] sm:$0xff] 0.0
          %521 = vst [vmem:[#allocation2 + $0x18] sm:$0xff] 0.0
          %522 = vst [vmem:[#allocation2 + $0x20] sm:$0xff] 0.0
          %523 = vst [vmem:[#allocation2 + $0x28] sm:$0xff] 0.0
          %524 = vst [vmem:[#allocation2 + $0x30] sm:$0xff] 0.0
          %525 = vst [vmem:[#allocation2 + $0x38] sm:$0xff] 0.0
          %526 = vst [vmem:[#allocation2 + $0x40] sm:$0xff] 0.0
          %527 = vst [vmem:[#allocation2 + $0x48] sm:$0xff] 0.0
          %528 = vst [vmem:[#allocation2 + $0x50] sm:$0xff] 0.0
          %529 = vst [vmem:[#allocation2 + $0x58] sm:$0xff] 0.0
          %530 = vst [vmem:[#allocation2 + $0x60] sm:$0xff] 0.0
          %531 = vst [vmem:[#allocation2 + $0x68] sm:$0xff] 0.0
          %532 = vst [vmem:[#allocation2 + $0x70] sm:$0xff] 0.0
          %533 = vst [vmem:[#allocation2 + $0x78] sm:$0xff] 0.0
          %534 = vst [vmem:[#allocation2 + $0x80] sm:$0xff] 0.0
          %535 = vst [vmem:[#allocation2 + $0x88] sm:$0xff] 0.0
          %536 = vst [vmem:[#allocation2 + $0x90] sm:$0xff] 0.0
          %537 = vst [vmem:[#allocation2 + $0x98] sm:$0xff] 0.0
          %538 = vst [vmem:[#allocation2 + $0xa0] sm:$0xff] 0.0
          %539 = vst [vmem:[#allocation2 + $0xa8] sm:$0xff] 0.0
          %540 = vst [vmem:[#allocation2 + $0xb0] sm:$0xff] 0.0
          %541 = vst [vmem:[#allocation2 + $0xb8] sm:$0xff] 0.0
          %542 = vst [vmem:[#allocation2 + $0xc0] sm:$0xff] 0.0
          %543 = vst [vmem:[#allocation2 + $0xc8] sm:$0xff] 0.0
          %544 = vst [vmem:[#allocation2 + $0xd0] sm:$0xff] 0.0
          %545 = vst [vmem:[#allocation2 + $0xd8] sm:$0xff] 0.0
          %546 = vst [vmem:[#allocation2 + $0xe0] sm:$0xff] 0.0
          %547 = vst [vmem:[#allocation2 + $0xe8] sm:$0xff] 0.0
          %548 = vst [vmem:[#allocation2 + $0xf0] sm:$0xff] 0.0
          %549 = vst [vmem:[#allocation2 + $0xf8] sm:$0xff] 0.0
        $region68: #{tpu_custom_call.1} parent=51 // pred_fallthru
          _
        %v550 = vld [vmem:[#allocation2] sm:$0xff]
        %v551 = vld [vmem:[#allocation2 + $0x8] sm:$0xff]
        %v552 = vld [vmem:[#allocation2 + $0x10] sm:$0xff]
        %v553 = vld [vmem:[#allocation2 + $0x18] sm:$0xff]
        %v554 = vld [vmem:[#allocation2 + $0x20] sm:$0xff]
        %v555 = vld [vmem:[#allocation2 + $0x28] sm:$0xff]
        %v556 = vld [vmem:[#allocation2 + $0x30] sm:$0xff]
        %v557 = vld [vmem:[#allocation2 + $0x38] sm:$0xff]
        %v558 = vld [vmem:[#allocation2 + $0x40] sm:$0xff]
        %v559 = vld [vmem:[#allocation2 + $0x48] sm:$0xff]
        %v560 = vld [vmem:[#allocation2 + $0x50] sm:$0xff]
        %v561 = vld [vmem:[#allocation2 + $0x58] sm:$0xff]
        %v562 = vld [vmem:[#allocation2 + $0x60] sm:$0xff]
        %v563 = vld [vmem:[#allocation2 + $0x68] sm:$0xff]
        %v564 = vld [vmem:[#allocation2 + $0x70] sm:$0xff]
        %v565 = vld [vmem:[#allocation2 + $0x78] sm:$0xff]
        %v566 = vld [vmem:[#allocation2 + $0x80] sm:$0xff]
        %v567 = vld [vmem:[#allocation2 + $0x88] sm:$0xff]
        %v568 = vld [vmem:[#allocation2 + $0x90] sm:$0xff]
        %v569 = vld [vmem:[#allocation2 + $0x98] sm:$0xff]
        %v570 = vld [vmem:[#allocation2 + $0xa0] sm:$0xff]
        %v571 = vld [vmem:[#allocation2 + $0xa8] sm:$0xff]
        %v572 = vld [vmem:[#allocation2 + $0xb0] sm:$0xff]
        %v573 = vld [vmem:[#allocation2 + $0xb8] sm:$0xff]
        %v574 = vld [vmem:[#allocation2 + $0xc0] sm:$0xff]
        %v575 = vld [vmem:[#allocation2 + $0xc8] sm:$0xff]
        %v576 = vld [vmem:[#allocation2 + $0xd0] sm:$0xff]
        %v577 = vld [vmem:[#allocation2 + $0xd8] sm:$0xff]
        %v578 = vld [vmem:[#allocation2 + $0xe0] sm:$0xff]
        %v579 = vld [vmem:[#allocation2 + $0xe8] sm:$0xff]
        %v580 = vld [vmem:[#allocation2 + $0xf0] sm:$0xff]
        %v581 = vld [vmem:[#allocation2 + $0xf8] sm:$0xff]
        %v582 = vld [vmem:[%s420] sm:$0xff]
        %v583 = vld [vmem:[%s420 + $0x8] sm:$0xff]
        %v584 = vld [vmem:[%s420 + $0x10] sm:$0xff]
        %v585 = vld [vmem:[%s420 + $0x18] sm:$0xff]
        %v586 = vld [vmem:[%s420 + $0x20] sm:$0xff]
        %v587 = vld [vmem:[%s420 + $0x28] sm:$0xff]
        %v588 = vld [vmem:[%s420 + $0x30] sm:$0xff]
        %v589 = vld [vmem:[%s420 + $0x38] sm:$0xff]
        %v590 = vld [vmem:[%s420 + $0x40] sm:$0xff]
        %v591 = vld [vmem:[%s420 + $0x48] sm:$0xff]
        %v592 = vld [vmem:[%s420 + $0x50] sm:$0xff]
        %v593 = vld [vmem:[%s420 + $0x58] sm:$0xff]
        %v594 = vld [vmem:[%s420 + $0x60] sm:$0xff]
        %v595 = vld [vmem:[%s420 + $0x68] sm:$0xff]
        %v596 = vld [vmem:[%s420 + $0x70] sm:$0xff]
        %v597 = vld [vmem:[%s420 + $0x78] sm:$0xff]
        %v598 = vld [vmem:[%s420 + $0x80] sm:$0xff]
        %v599 = vld [vmem:[%s420 + $0x88] sm:$0xff]
        %v600 = vld [vmem:[%s420 + $0x90] sm:$0xff]
        %v601 = vld [vmem:[%s420 + $0x98] sm:$0xff]
        %v602 = vld [vmem:[%s420 + $0xa0] sm:$0xff]
        %v603 = vld [vmem:[%s420 + $0xa8] sm:$0xff]
        %v604 = vld [vmem:[%s420 + $0xb0] sm:$0xff]
        %v605 = vld [vmem:[%s420 + $0xb8] sm:$0xff]
        %v606 = vld [vmem:[%s420 + $0xc0] sm:$0xff]
        %v607 = vld [vmem:[%s420 + $0xc8] sm:$0xff]
        %v608 = vld [vmem:[%s420 + $0xd0] sm:$0xff]
        %v609 = vld [vmem:[%s420 + $0xd8] sm:$0xff]
        %v610 = vld [vmem:[%s420 + $0xe0] sm:$0xff]
        %v611 = vld [vmem:[%s420 + $0xe8] sm:$0xff]
        %v612 = vld [vmem:[%s420 + $0xf0] sm:$0xff]
        %v613 = vld [vmem:[%s420 + $0xf8] sm:$0xff]
        %v614 = vld [vmem:[%s496] sm:$0xf]
        %v615 = vld [vmem:[%s496 + $0x4] sm:$0xf]
        %v616 = vld [vmem:[%s496 + $0x8] sm:$0xf]
        %v617 = vld [vmem:[%s496 + $0xc] sm:$0xf]
        %v618 = vld [vmem:[%s496 + $0x10] sm:$0xf]
        %v619 = vld [vmem:[%s496 + $0x14] sm:$0xf]
        %v620 = vld [vmem:[%s496 + $0x18] sm:$0xf]
        %v621 = vld [vmem:[%s496 + $0x1c] sm:$0xf]
        %v622 = vld [vmem:[%s496 + $0x20] sm:$0xf]
        %v623 = vld [vmem:[%s496 + $0x24] sm:$0xf]
        %v624 = vld [vmem:[%s496 + $0x28] sm:$0xf]
        %v625 = vld [vmem:[%s496 + $0x2c] sm:$0xf]
        %v626 = vld [vmem:[%s496 + $0x30] sm:$0xf]
        %v627 = vld [vmem:[%s496 + $0x34] sm:$0xf]
        %v628 = vld [vmem:[%s496 + $0x38] sm:$0xf]
        %v629 = vld [vmem:[%s496 + $0x3c] sm:$0xf]
        %v630 = vld [vmem:[%s496 + $0x40] sm:$0xf]
        %v631 = vld [vmem:[%s496 + $0x44] sm:$0xf]
        %v632 = vld [vmem:[%s496 + $0x48] sm:$0xf]
        %v633 = vld [vmem:[%s496 + $0x4c] sm:$0xf]
        %v634 = vld [vmem:[%s496 + $0x50] sm:$0xf]
        %v635 = vld [vmem:[%s496 + $0x54] sm:$0xf]
        %v636 = vld [vmem:[%s496 + $0x58] sm:$0xf]
        %v637 = vld [vmem:[%s496 + $0x5c] sm:$0xf]
        %v638 = vld [vmem:[%s496 + $0x60] sm:$0xf]
        %v639 = vld [vmem:[%s496 + $0x64] sm:$0xf]
        %v640 = vld [vmem:[%s496 + $0x68] sm:$0xf]
        %v641 = vld [vmem:[%s496 + $0x6c] sm:$0xf]
        %v642 = vld [vmem:[%s496 + $0x70] sm:$0xf]
        %v643 = vld [vmem:[%s496 + $0x74] sm:$0xf]
        %v644 = vld [vmem:[%s496 + $0x78] sm:$0xf]
        %v645 = vld [vmem:[%s496 + $0x7c] sm:$0xf]
        %v678 = vunpack.c.l.b16 %v582
        %v679 = vunpack.c.h.b16 %v582
        %v680 = vunpack.c.l.b16 %v583
        %v681 = vunpack.c.h.b16 %v583
        %v682 = vunpack.c.l.b16 %v584
        %v683 = vunpack.c.h.b16 %v584
        %v684 = vunpack.c.l.b16 %v585
        %v685 = vunpack.c.h.b16 %v585
        %v686 = vunpack.c.l.b16 %v586
        %v687 = vunpack.c.h.b16 %v586
        %v688 = vunpack.c.l.b16 %v587
        %v689 = vunpack.c.h.b16 %v587
        %v690 = vunpack.c.l.b16 %v588
        %v691 = vunpack.c.h.b16 %v588
        %v692 = vunpack.c.l.b16 %v589
        %v693 = vunpack.c.h.b16 %v589
        %v694 = vunpack.c.l.b16 %v590
        %v695 = vunpack.c.h.b16 %v590
        %v696 = vunpack.c.l.b16 %v591
        %v697 = vunpack.c.h.b16 %v591
        %v698 = vunpack.c.l.b16 %v592
        %v699 = vunpack.c.h.b16 %v592
        %v700 = vunpack.c.l.b16 %v593
        %v701 = vunpack.c.h.b16 %v593
        %v702 = vunpack.c.l.b16 %v594
        %v703 = vunpack.c.h.b16 %v594
        %v704 = vunpack.c.l.b16 %v595
        %v705 = vunpack.c.h.b16 %v595
        %v706 = vunpack.c.l.b16 %v596
        %v707 = vunpack.c.h.b16 %v596
        %v708 = vunpack.c.l.b16 %v597
        %v709 = vunpack.c.h.b16 %v597
        %v710 = vunpack.c.l.b16 %v598
        %v711 = vunpack.c.h.b16 %v598
        %v712 = vunpack.c.l.b16 %v599
        %v713 = vunpack.c.h.b16 %v599
        %v714 = vunpack.c.l.b16 %v600
        %v715 = vunpack.c.h.b16 %v600
        %v716 = vunpack.c.l.b16 %v601
        %v717 = vunpack.c.h.b16 %v601
        %v718 = vunpack.c.l.b16 %v602
        %v719 = vunpack.c.h.b16 %v602
        %v720 = vunpack.c.l.b16 %v603
        %v721 = vunpack.c.h.b16 %v603
        %v722 = vunpack.c.l.b16 %v604
        %v723 = vunpack.c.h.b16 %v604
        %v724 = vunpack.c.l.b16 %v605
        %v725 = vunpack.c.h.b16 %v605
        %v726 = vunpack.c.l.b16 %v606
        %v727 = vunpack.c.h.b16 %v606
        %v728 = vunpack.c.l.b16 %v607
        %v729 = vunpack.c.h.b16 %v607
        %v730 = vunpack.c.l.b16 %v608
        %v731 = vunpack.c.h.b16 %v608
        %v732 = vunpack.c.l.b16 %v609
        %v733 = vunpack.c.h.b16 %v609
        %v734 = vunpack.c.l.b16 %v610
        %v735 = vunpack.c.h.b16 %v610
        %v736 = vunpack.c.l.b16 %v611
        %v737 = vunpack.c.h.b16 %v611
        %v738 = vunpack.c.l.b16 %v612
        %v739 = vunpack.c.h.b16 %v612
        %v740 = vunpack.c.l.b16 %v613
        %v741 = vunpack.c.h.b16 %v613
        %v742 = vpack.c.b16 %v680, %v678
        %v743 = vpack.c.b16 %v681, %v679
        %v744 = vpack.c.b16 %v684, %v682
        %v745 = vpack.c.b16 %v685, %v683
        %v746 = vpack.c.b16 %v688, %v686
        %v747 = vpack.c.b16 %v689, %v687
        %v748 = vpack.c.b16 %v692, %v690
        %v749 = vpack.c.b16 %v693, %v691
        %v750 = vpack.c.b16 %v696, %v694
        %v751 = vpack.c.b16 %v697, %v695
        %v752 = vpack.c.b16 %v700, %v698
        %v753 = vpack.c.b16 %v701, %v699
        %v754 = vpack.c.b16 %v704, %v702
        %v755 = vpack.c.b16 %v705, %v703
        %v756 = vpack.c.b16 %v708, %v706
        %v757 = vpack.c.b16 %v709, %v707
        %v758 = vpack.c.b16 %v712, %v710
        %v759 = vpack.c.b16 %v713, %v711
        %v760 = vpack.c.b16 %v716, %v714
        %v761 = vpack.c.b16 %v717, %v715
        %v762 = vpack.c.b16 %v720, %v718
        %v763 = vpack.c.b16 %v721, %v719
        %v764 = vpack.c.b16 %v724, %v722
        %v765 = vpack.c.b16 %v725, %v723
        %v766 = vpack.c.b16 %v728, %v726
        %v767 = vpack.c.b16 %v729, %v727
        %v768 = vpack.c.b16 %v732, %v730
        %v769 = vpack.c.b16 %v733, %v731
        %v770 = vpack.c.b16 %v736, %v734
        %v771 = vpack.c.b16 %v737, %v735
        %v772 = vpack.c.b16 %v740, %v738
        %v773 = vpack.c.b16 %v741, %v739
        %v838 = vunpack.c.l.b16 %v614
        %v839 = vunpack.c.l.b16 %v615
        %v840 = vunpack.c.l.b16 %v616
        %v841 = vunpack.c.l.b16 %v617
        %v842 = vunpack.c.l.b16 %v618
        %v843 = vunpack.c.l.b16 %v619
        %v844 = vunpack.c.l.b16 %v620
        %v845 = vunpack.c.l.b16 %v621
        %v846 = vunpack.c.l.b16 %v622
        %v847 = vunpack.c.l.b16 %v623
        %v848 = vunpack.c.l.b16 %v624
        %v849 = vunpack.c.l.b16 %v625
        %v850 = vunpack.c.l.b16 %v626
        %v851 = vunpack.c.l.b16 %v627
        %v852 = vunpack.c.l.b16 %v628
        %v853 = vunpack.c.l.b16 %v629
        %v854 = vunpack.c.l.b16 %v630
        %v855 = vunpack.c.l.b16 %v631
        %v856 = vunpack.c.l.b16 %v632
        %v857 = vunpack.c.l.b16 %v633
        %v858 = vunpack.c.l.b16 %v634
        %v859 = vunpack.c.l.b16 %v635
        %v860 = vunpack.c.l.b16 %v636
        %v861 = vunpack.c.l.b16 %v637
        %v862 = vunpack.c.l.b16 %v638
        %v863 = vunpack.c.l.b16 %v639
        %v864 = vunpack.c.l.b16 %v640
        %v865 = vunpack.c.l.b16 %v641
        %v866 = vunpack.c.l.b16 %v642
        %v867 = vunpack.c.l.b16 %v643
        %v868 = vunpack.c.l.b16 %v644
        %v869 = vunpack.c.l.b16 %v645
        %v870 = vpack.c.b16 %v839, %v838
        %v871 = vpack.c.b16 %v841, %v840
        %v872 = vpack.c.b16 %v843, %v842
        %v873 = vpack.c.b16 %v845, %v844
        %v874 = vpack.c.b16 %v847, %v846
        %v875 = vpack.c.b16 %v849, %v848
        %v876 = vpack.c.b16 %v851, %v850
        %v877 = vpack.c.b16 %v853, %v852
        %v878 = vpack.c.b16 %v855, %v854
        %v879 = vpack.c.b16 %v857, %v856
        %v880 = vpack.c.b16 %v859, %v858
        %v881 = vpack.c.b16 %v861, %v860
        %v882 = vpack.c.b16 %v863, %v862
        %v883 = vpack.c.b16 %v865, %v864
        %v884 = vpack.c.b16 %v867, %v866
        %v885 = vpack.c.b16 %v869, %v868
        %902 = vmatprep.subr.bf16.mxu0 0
        %903 = vmatpush1.bf16.msra.mxu0 %v877
        %904 = vmatprep.subr.bf16.mxu0 0
        %905 = vmatpush1.bf16.msra.mxu0 %v876
        %906 = vmatprep.subr.bf16.mxu0 0
        %907 = vmatpush1.bf16.msra.mxu0 %v875
        %908 = vmatprep.subr.bf16.mxu0 0
        %909 = vmatpush1.bf16.msra.mxu0 %v874
        %910 = vmatprep.subr.bf16.mxu0 0
        %911 = vmatpush1.bf16.msra.mxu0 %v873
        %912 = vmatprep.subr.bf16.mxu0 0
        %913 = vmatpush1.bf16.msra.mxu0 %v872
        %914 = vmatprep.subr.bf16.mxu0 0
        %915 = vmatpush1.bf16.msra.mxu0 %v871
        %916 = vmatprep.subr.bf16.mxu0 0
        %917 = vmatpush1.bf16.msra.mxu0 %v870
        %918 = vmatprep.subr.bf16.mxu0 0
        %919 = vmatpush2.bf16.msra.mxu0 %v885
        %920 = vmatprep.subr.bf16.mxu0 0
        %921 = vmatpush2.bf16.msra.mxu0 %v884
        %922 = vmatprep.subr.bf16.mxu0 0
        %923 = vmatpush2.bf16.msra.mxu0 %v883
        %924 = vmatprep.subr.bf16.mxu0 0
        %925 = vmatpush2.bf16.msra.mxu0 %v882
        %926 = vmatprep.subr.bf16.mxu0 0
        %927 = vmatpush2.bf16.msra.mxu0 %v881
        %928 = vmatprep.subr.bf16.mxu0 0
        %929 = vmatpush2.bf16.msra.mxu0 %v880
        %930 = vmatprep.subr.bf16.mxu0 0
        %931 = vmatpush2.bf16.msra.mxu0 %v879
        %932 = vmatprep.subr.bf16.mxu0 0
        %933 = vmatpush2.bf16.msra.mxu0 %v878
        %934 = vmatprep.mubr.bf16.mxu0 %v743
        %935 = vmatmul.mubr.bf16.gmra.mxu0 %v742
        %v936 = vpop.f32.mrf.mxu0
        %v937 = vadd.f32 0.0, %v936
        %v938 = vpop.f32.mrf.mxu0
        %v939 = vpop.f32.mrf.mxu0
        %v940 = vadd.f32 0.0, %v939
        %v941 = vpop.f32.mrf.mxu0
        %942 = vmatprep.mubr.bf16.mxu0 %v745
        %943 = vmatmul.mubr.bf16.gmra.mxu0 %v744
        %v944 = vpop.f32.mrf.mxu0
        %v945 = vadd.f32 0.0, %v944
        %v946 = vpop.f32.mrf.mxu0
        %v947 = vpop.f32.mrf.mxu0
        %v948 = vadd.f32 0.0, %v947
        %v949 = vpop.f32.mrf.mxu0
        %950 = vmatprep.mubr.bf16.mxu0 %v747
        %951 = vmatmul.mubr.bf16.gmra.mxu0 %v746
        %v952 = vpop.f32.mrf.mxu0
        %v953 = vadd.f32 0.0, %v952
        %v954 = vpop.f32.mrf.mxu0
        %v955 = vpop.f32.mrf.mxu0
        %v956 = vadd.f32 0.0, %v955
        %v957 = vpop.f32.mrf.mxu0
        %958 = vmatprep.mubr.bf16.mxu0 %v749
        %959 = vmatmul.mubr.bf16.gmra.mxu0 %v748
        %v960 = vpop.f32.mrf.mxu0
        %v961 = vadd.f32 0.0, %v960
        %v962 = vpop.f32.mrf.mxu0
        %v963 = vpop.f32.mrf.mxu0
        %v964 = vadd.f32 0.0, %v963
        %v965 = vpop.f32.mrf.mxu0
        %966 = vmatprep.mubr.bf16.mxu0 %v751
        %967 = vmatmul.mubr.bf16.gmra.mxu0 %v750
        %v968 = vpop.f32.mrf.mxu0
        %v969 = vadd.f32 0.0, %v968
        %v970 = vpop.f32.mrf.mxu0
        %v971 = vpop.f32.mrf.mxu0
        %v972 = vadd.f32 0.0, %v971
        %v973 = vpop.f32.mrf.mxu0
        %974 = vmatprep.mubr.bf16.mxu0 %v753
        %975 = vmatmul.mubr.bf16.gmra.mxu0 %v752
        %v976 = vpop.f32.mrf.mxu0
        %v977 = vadd.f32 0.0, %v976
        %v978 = vpop.f32.mrf.mxu0
        %v979 = vpop.f32.mrf.mxu0
        %v980 = vadd.f32 0.0, %v979
        %v981 = vpop.f32.mrf.mxu0
        %982 = vmatprep.mubr.bf16.mxu0 %v755
        %983 = vmatmul.mubr.bf16.gmra.mxu0 %v754
        %v984 = vpop.f32.mrf.mxu0
        %v985 = vadd.f32 0.0, %v984
        %v986 = vpop.f32.mrf.mxu0
        %v987 = vpop.f32.mrf.mxu0
        %v988 = vadd.f32 0.0, %v987
        %v989 = vpop.f32.mrf.mxu0
        %990 = vmatprep.mubr.bf16.mxu0 %v757
        %991 = vmatmul.mubr.bf16.gmra.mxu0 %v756
        %v992 = vpop.f32.mrf.mxu0
        %v993 = vadd.f32 0.0, %v992
        %v994 = vpop.f32.mrf.mxu0
        %v995 = vpop.f32.mrf.mxu0
        %v996 = vadd.f32 0.0, %v995
        %v997 = vpop.f32.mrf.mxu0
        %998 = vmatprep.mubr.bf16.mxu0 %v759
        %999 = vmatmul.mubr.bf16.gmra.mxu0 %v758
        %v1000 = vpop.f32.mrf.mxu0
        %v1001 = vadd.f32 0.0, %v1000
        %v1002 = vpop.f32.mrf.mxu0
        %v1003 = vpop.f32.mrf.mxu0
        %v1004 = vadd.f32 0.0, %v1003
        %v1005 = vpop.f32.mrf.mxu0
        %1006 = vmatprep.mubr.bf16.mxu0 %v761
        %1007 = vmatmul.mubr.bf16.gmra.mxu0 %v760
        %v1008 = vpop.f32.mrf.mxu0
        %v1009 = vadd.f32 0.0, %v1008
        %v1010 = vpop.f32.mrf.mxu0
        %v1011 = vpop.f32.mrf.mxu0
        %v1012 = vadd.f32 0.0, %v1011
        %v1013 = vpop.f32.mrf.mxu0
        %1014 = vmatprep.mubr.bf16.mxu0 %v763
        %1015 = vmatmul.mubr.bf16.gmra.mxu0 %v762
        %v1016 = vpop.f32.mrf.mxu0
        %v1017 = vadd.f32 0.0, %v1016
        %v1018 = vpop.f32.mrf.mxu0
        %v1019 = vpop.f32.mrf.mxu0
        %v1020 = vadd.f32 0.0, %v1019
        %v1021 = vpop.f32.mrf.mxu0
        %1022 = vmatprep.mubr.bf16.mxu0 %v765
        %1023 = vmatmul.mubr.bf16.gmra.mxu0 %v764
        %v1024 = vpop.f32.mrf.mxu0
        %v1025 = vadd.f32 0.0, %v1024
        %v1026 = vpop.f32.mrf.mxu0
        %v1027 = vpop.f32.mrf.mxu0
        %v1028 = vadd.f32 0.0, %v1027
        %v1029 = vpop.f32.mrf.mxu0
        %1030 = vmatprep.mubr.bf16.mxu0 %v767
        %1031 = vmatmul.mubr.bf16.gmra.mxu0 %v766
        %v1032 = vpop.f32.mrf.mxu0
        %v1033 = vadd.f32 0.0, %v1032
        %v1034 = vpop.f32.mrf.mxu0
        %v1035 = vpop.f32.mrf.mxu0
        %v1036 = vadd.f32 0.0, %v1035
        %v1037 = vpop.f32.mrf.mxu0
        %1038 = vmatprep.mubr.bf16.mxu0 %v769
        %1039 = vmatmul.mubr.bf16.gmra.mxu0 %v768
        %v1040 = vpop.f32.mrf.mxu0
        %v1041 = vadd.f32 0.0, %v1040
        %v1042 = vpop.f32.mrf.mxu0
        %v1043 = vpop.f32.mrf.mxu0
        %v1044 = vadd.f32 0.0, %v1043
        %v1045 = vpop.f32.mrf.mxu0
        %1046 = vmatprep.mubr.bf16.mxu0 %v771
        %1047 = vmatmul.mubr.bf16.gmra.mxu0 %v770
        %v1048 = vpop.f32.mrf.mxu0
        %v1049 = vadd.f32 0.0, %v1048
        %v1050 = vpop.f32.mrf.mxu0
        %v1051 = vpop.f32.mrf.mxu0
        %v1052 = vadd.f32 0.0, %v1051
        %v1053 = vpop.f32.mrf.mxu0
        %1054 = vmatprep.mubr.bf16.mxu0 %v773
        %1055 = vmatmul.mubr.bf16.gmra.mxu0 %v772
        %v1056 = vpop.f32.mrf.mxu0
        %v1057 = vadd.f32 0.0, %v1056
        %v1058 = vpop.f32.mrf.mxu0
        %v1059 = vpop.f32.mrf.mxu0
        %v1060 = vadd.f32 0.0, %v1059
        %v1061 = vpop.f32.mrf.mxu0
        %1062 = vdwg.mxu0
        %v1063 = vadd.f32 %v550, %v937
        %v1064 = vadd.f32 %v551, %v940
        %v1065 = vadd.f32 %v552, %v945
        %v1066 = vadd.f32 %v553, %v948
        %v1067 = vadd.f32 %v554, %v953
        %v1068 = vadd.f32 %v555, %v956
        %v1069 = vadd.f32 %v556, %v961
        %v1070 = vadd.f32 %v557, %v964
        %v1071 = vadd.f32 %v558, %v969
        %v1072 = vadd.f32 %v559, %v972
        %v1073 = vadd.f32 %v560, %v977
        %v1074 = vadd.f32 %v561, %v980
        %v1075 = vadd.f32 %v562, %v985
        %v1076 = vadd.f32 %v563, %v988
        %v1077 = vadd.f32 %v564, %v993
        %v1078 = vadd.f32 %v565, %v996
        %v1079 = vadd.f32 %v566, %v1001
        %v1080 = vadd.f32 %v567, %v1004
        %v1081 = vadd.f32 %v568, %v1009
        %v1082 = vadd.f32 %v569, %v1012
        %v1083 = vadd.f32 %v570, %v1017
        %v1084 = vadd.f32 %v571, %v1020
        %v1085 = vadd.f32 %v572, %v1025
        %v1086 = vadd.f32 %v573, %v1028
        %v1087 = vadd.f32 %v574, %v1033
        %v1088 = vadd.f32 %v575, %v1036
        %v1089 = vadd.f32 %v576, %v1041
        %v1090 = vadd.f32 %v577, %v1044
        %v1091 = vadd.f32 %v578, %v1049
        %v1092 = vadd.f32 %v579, %v1052
        %v1093 = vadd.f32 %v580, %v1057
        %v1094 = vadd.f32 %v581, %v1060
        %1095 = vst [vmem:[#allocation2] sm:$0xff] %v1063
        %1096 = vst [vmem:[#allocation2 + $0x8] sm:$0xff] %v1064
        %1097 = vst [vmem:[#allocation2 + $0x10] sm:$0xff] %v1065
        %1098 = vst [vmem:[#allocation2 + $0x18] sm:$0xff] %v1066
        %1099 = vst [vmem:[#allocation2 + $0x20] sm:$0xff] %v1067
        %1100 = vst [vmem:[#allocation2 + $0x28] sm:$0xff] %v1068
        %1101 = vst [vmem:[#allocation2 + $0x30] sm:$0xff] %v1069
        %1102 = vst [vmem:[#allocation2 + $0x38] sm:$0xff] %v1070
        %1103 = vst [vmem:[#allocation2 + $0x40] sm:$0xff] %v1071
        %1104 = vst [vmem:[#allocation2 + $0x48] sm:$0xff] %v1072
        %1105 = vst [vmem:[#allocation2 + $0x50] sm:$0xff] %v1073
        %1106 = vst [vmem:[#allocation2 + $0x58] sm:$0xff] %v1074
        %1107 = vst [vmem:[#allocation2 + $0x60] sm:$0xff] %v1075
        %1108 = vst [vmem:[#allocation2 + $0x68] sm:$0xff] %v1076
        %1109 = vst [vmem:[#allocation2 + $0x70] sm:$0xff] %v1077
        %1110 = vst [vmem:[#allocation2 + $0x78] sm:$0xff] %v1078
        %1111 = vst [vmem:[#allocation2 + $0x80] sm:$0xff] %v1079
        %1112 = vst [vmem:[#allocation2 + $0x88] sm:$0xff] %v1080
        %1113 = vst [vmem:[#allocation2 + $0x90] sm:$0xff] %v1081
        %1114 = vst [vmem:[#allocation2 + $0x98] sm:$0xff] %v1082
        %1115 = vst [vmem:[#allocation2 + $0xa0] sm:$0xff] %v1083
        %1116 = vst [vmem:[#allocation2 + $0xa8] sm:$0xff] %v1084
        %1117 = vst [vmem:[#allocation2 + $0xb0] sm:$0xff] %v1085
        %1118 = vst [vmem:[#allocation2 + $0xb8] sm:$0xff] %v1086
        %1119 = vst [vmem:[#allocation2 + $0xc0] sm:$0xff] %v1087
        %1120 = vst [vmem:[#allocation2 + $0xc8] sm:$0xff] %v1088
        %1121 = vst [vmem:[#allocation2 + $0xd0] sm:$0xff] %v1089
        %1122 = vst [vmem:[#allocation2 + $0xd8] sm:$0xff] %v1090
        %1123 = vst [vmem:[#allocation2 + $0xe0] sm:$0xff] %v1091
        %1124 = vst [vmem:[#allocation2 + $0xe8] sm:$0xff] %v1092
        %1125 = vst [vmem:[#allocation2 + $0xf0] sm:$0xff] %v1093
        %1126 = vst [vmem:[#allocation2 + $0xf8] sm:$0xff] %v1094
        %p1127 = scmp.eq.s32.totalorder %s37, 1
        // Predicated region
        $region69: #{tpu_custom_call.1} parent=51 // pred_check
          %p1128 = pneg %p1127
        $region70: #{tpu_custom_call.1} parent=51 // pred_check_branch
          %1130 = sbr.rel (%p1128) target = $region72
        $region71: #{tpu_custom_call.1} parent=51 // pred_region
          %v1131 = vld [vmem:[%s502] sm:$0xf]
          %v1132 = vld [vmem:[%s502 + $0x4] sm:$0xf]
          %v1133 = vld [vmem:[%s502 + $0x8] sm:$0xf]
          %v1134 = vld [vmem:[%s502 + $0xc] sm:$0xf]
          %v1135 = vld [vmem:[%s502 + $0x10] sm:$0xf]
          %v1136 = vld [vmem:[%s502 + $0x14] sm:$0xf]
          %v1137 = vld [vmem:[%s502 + $0x18] sm:$0xf]
          %v1138 = vld [vmem:[%s502 + $0x1c] sm:$0xf]
          %v1139 = vld [vmem:[%s502 + $0x20] sm:$0xf]
          %v1140 = vld [vmem:[%s502 + $0x24] sm:$0xf]
          %v1141 = vld [vmem:[%s502 + $0x28] sm:$0xf]
          %v1142 = vld [vmem:[%s502 + $0x2c] sm:$0xf]
          %v1143 = vld [vmem:[%s502 + $0x30] sm:$0xf]
          %v1144 = vld [vmem:[%s502 + $0x34] sm:$0xf]
          %v1145 = vld [vmem:[%s502 + $0x38] sm:$0xf]
          %v1146 = vld [vmem:[%s502 + $0x3c] sm:$0xf]
          %v1147 = vld [vmem:[%s502 + $0x40] sm:$0xf]
          %v1148 = vld [vmem:[%s502 + $0x44] sm:$0xf]
          %v1149 = vld [vmem:[%s502 + $0x48] sm:$0xf]
          %v1150 = vld [vmem:[%s502 + $0x4c] sm:$0xf]
          %v1151 = vld [vmem:[%s502 + $0x50] sm:$0xf]
          %v1152 = vld [vmem:[%s502 + $0x54] sm:$0xf]
          %v1153 = vld [vmem:[%s502 + $0x58] sm:$0xf]
          %v1154 = vld [vmem:[%s502 + $0x5c] sm:$0xf]
          %v1155 = vld [vmem:[%s502 + $0x60] sm:$0xf]
          %v1156 = vld [vmem:[%s502 + $0x64] sm:$0xf]
          %v1157 = vld [vmem:[%s502 + $0x68] sm:$0xf]
          %v1158 = vld [vmem:[%s502 + $0x6c] sm:$0xf]
          %v1159 = vld [vmem:[%s502 + $0x70] sm:$0xf]
          %v1160 = vld [vmem:[%s502 + $0x74] sm:$0xf]
          %v1161 = vld [vmem:[%s502 + $0x78] sm:$0xf]
          %v1162 = vld [vmem:[%s502 + $0x7c] sm:$0xf]
          %v1163 = vld [vmem:[#allocation6] sm:$0xf]
          %v1164 = vld [vmem:[#allocation6 + $0x4] sm:$0xf]
          %v1165 = vld [vmem:[#allocation6 + $0x8] sm:$0xf]
          %v1166 = vld [vmem:[#allocation6 + $0xc] sm:$0xf]
          %v1167 = vld [vmem:[#allocation6 + $0x10] sm:$0xf]
          %v1168 = vld [vmem:[#allocation6 + $0x14] sm:$0xf]
          %v1169 = vld [vmem:[#allocation6 + $0x18] sm:$0xf]
          %v1170 = vld [vmem:[#allocation6 + $0x1c] sm:$0xf]
          %v1171 = vld [vmem:[#allocation6 + $0x20] sm:$0xf]
          %v1172 = vld [vmem:[#allocation6 + $0x24] sm:$0xf]
          %v1173 = vld [vmem:[#allocation6 + $0x28] sm:$0xf]
          %v1174 = vld [vmem:[#allocation6 + $0x2c] sm:$0xf]
          %v1175 = vld [vmem:[#allocation6 + $0x30] sm:$0xf]
          %v1176 = vld [vmem:[#allocation6 + $0x34] sm:$0xf]
          %v1177 = vld [vmem:[#allocation6 + $0x38] sm:$0xf]
          %v1178 = vld [vmem:[#allocation6 + $0x3c] sm:$0xf]
          %v1179 = vld [vmem:[%s5] sm:$0x1]
          %v1181 = vlaneseq
          %v1182 = vshrl.u32 %v1181, 7
          %v1183 = vsub.s32 0, %v1182
          %v1184 = vrot.slane %v1179, %v1183
          %v1218 = vunpack.c.l.b16 %v1131
          %v1219 = vunpack.c.l.b16 %v1132
          %v1220 = vunpack.c.l.b16 %v1133
          %v1221 = vunpack.c.l.b16 %v1134
          %v1222 = vunpack.c.l.b16 %v1135
          %v1223 = vunpack.c.l.b16 %v1136
          %v1224 = vunpack.c.l.b16 %v1137
          %v1225 = vunpack.c.l.b16 %v1138
          %v1226 = vunpack.c.l.b16 %v1139
          %v1227 = vunpack.c.l.b16 %v1140
          %v1228 = vunpack.c.l.b16 %v1141
          %v1229 = vunpack.c.l.b16 %v1142
          %v1230 = vunpack.c.l.b16 %v1143
          %v1231 = vunpack.c.l.b16 %v1144
          %v1232 = vunpack.c.l.b16 %v1145
          %v1233 = vunpack.c.l.b16 %v1146
          %v1234 = vunpack.c.l.b16 %v1147
          %v1235 = vunpack.c.l.b16 %v1148
          %v1236 = vunpack.c.l.b16 %v1149
          %v1237 = vunpack.c.l.b16 %v1150
          %v1238 = vunpack.c.l.b16 %v1151
          %v1239 = vunpack.c.l.b16 %v1152
          %v1240 = vunpack.c.l.b16 %v1153
          %v1241 = vunpack.c.l.b16 %v1154
          %v1242 = vunpack.c.l.b16 %v1155
          %v1243 = vunpack.c.l.b16 %v1156
          %v1244 = vunpack.c.l.b16 %v1157
          %v1245 = vunpack.c.l.b16 %v1158
          %v1246 = vunpack.c.l.b16 %v1159
          %v1247 = vunpack.c.l.b16 %v1160
          %v1248 = vunpack.c.l.b16 %v1161
          %v1249 = vunpack.c.l.b16 %v1162
          %v1250 = vpack.c.b16 %v1219, %v1218
          %v1251 = vpack.c.b16 %v1221, %v1220
          %v1252 = vpack.c.b16 %v1223, %v1222
          %v1253 = vpack.c.b16 %v1225, %v1224
          %v1254 = vpack.c.b16 %v1227, %v1226
          %v1255 = vpack.c.b16 %v1229, %v1228
          %v1256 = vpack.c.b16 %v1231, %v1230
          %v1257 = vpack.c.b16 %v1233, %v1232
          %v1258 = vpack.c.b16 %v1235, %v1234
          %v1259 = vpack.c.b16 %v1237, %v1236
          %v1260 = vpack.c.b16 %v1239, %v1238
          %v1261 = vpack.c.b16 %v1241, %v1240
          %v1262 = vpack.c.b16 %v1243, %v1242
          %v1263 = vpack.c.b16 %v1245, %v1244
          %v1264 = vpack.c.b16 %v1247, %v1246
          %v1265 = vpack.c.b16 %v1249, %v1248
          %v1298 = vunpack.c.l.b16 %v1163
          %v1299 = vunpack.c.l.b16 %v1164
          %v1300 = vunpack.c.l.b16 %v1165
          %v1301 = vunpack.c.l.b16 %v1166
          %v1302 = vunpack.c.l.b16 %v1167
          %v1303 = vunpack.c.l.b16 %v1168
          %v1304 = vunpack.c.l.b16 %v1169
          %v1305 = vunpack.c.l.b16 %v1170
          %v1306 = vunpack.c.l.b16 %v1171
          %v1307 = vunpack.c.l.b16 %v1172
          %v1308 = vunpack.c.l.b16 %v1173
          %v1309 = vunpack.c.l.b16 %v1174
          %v1310 = vunpack.c.l.b16 %v1175
          %v1311 = vunpack.c.l.b16 %v1176
          %v1312 = vunpack.c.l.b16 %v1177
          %v1313 = vunpack.c.l.b16 %v1178
          %v1314 = vpack.c.b16 %v1299, %v1298
          %v1315 = vpack.c.b16 %v1301, %v1300
          %v1316 = vpack.c.b16 %v1303, %v1302
          %v1317 = vpack.c.b16 %v1305, %v1304
          %v1318 = vpack.c.b16 %v1307, %v1306
          %v1319 = vpack.c.b16 %v1309, %v1308
          %v1320 = vpack.c.b16 %v1311, %v1310
          %v1321 = vpack.c.b16 %v1313, %v1312
          %1330 = vmatprep.subr.bf16.mxu0 0
          %1331 = vmatpush1.bf16.msra.mxu0 %v1321
          %1332 = vmatprep.subr.bf16.mxu0 0
          %1333 = vmatpush1.bf16.msra.mxu0 %v1320
          %1334 = vmatprep.subr.bf16.mxu0 0
          %1335 = vmatpush1.bf16.msra.mxu0 %v1319
          %1336 = vmatprep.subr.bf16.mxu0 0
          %1337 = vmatpush1.bf16.msra.mxu0 %v1318
          %1338 = vmatprep.subr.bf16.mxu0 0
          %1339 = vmatpush1.bf16.msra.mxu0 %v1317
          %1340 = vmatprep.subr.bf16.mxu0 0
          %1341 = vmatpush1.bf16.msra.mxu0 %v1316
          %1342 = vmatprep.subr.bf16.mxu0 0
          %1343 = vmatpush1.bf16.msra.mxu0 %v1315
          %1344 = vmatprep.subr.bf16.mxu0 0
          %1345 = vmatpush1.bf16.msra.mxu0 %v1314
          %1346 = vmatprep.subr.bf16.mxu0 0
          %1347 = vmatpush2.bf16.msra.mxu0 0
          %1348 = vmatprep.subr.bf16.mxu0 0
          %1349 = vmatpush2.bf16.msra.mxu0 0
          %1350 = vmatprep.subr.bf16.mxu0 0
          %1351 = vmatpush2.bf16.msra.mxu0 0
          %1352 = vmatprep.subr.bf16.mxu0 0
          %1353 = vmatpush2.bf16.msra.mxu0 0
          %1354 = vmatprep.subr.bf16.mxu0 0
          %1355 = vmatpush2.bf16.msra.mxu0 0
          %1356 = vmatprep.subr.bf16.mxu0 0
          %1357 = vmatpush2.bf16.msra.mxu0 0
          %1358 = vmatprep.subr.bf16.mxu0 0
          %1359 = vmatpush2.bf16.msra.mxu0 0
          %1360 = vmatprep.subr.bf16.mxu0 0
          %1361 = vmatpush2.bf16.msra.mxu0 0
          %1362 = vmatprep.mubr.bf16.mxu0 0
          %1363 = vmatmul.mubr.bf16.gmra.mxu0 %v1250
          %v1364 = vpop.f32.mrf.mxu0
          %v1365 = vadd.f32 %v1184, %v1364
          %v1366 = vpop.f32.mrf.mxu0
          %v1367 = vpop.f32.mrf.mxu0
          %v1368 = vadd.f32 %v1184, %v1367
          %v1369 = vpop.f32.mrf.mxu0
          %1370 = vmatprep.mubr.bf16.mxu0 0
          %1371 = vmatmul.mubr.bf16.gmra.mxu0 %v1251
          %v1372 = vpop.f32.mrf.mxu0
          %v1373 = vadd.f32 %v1184, %v1372
          %v1374 = vpop.f32.mrf.mxu0
          %v1375 = vpop.f32.mrf.mxu0
          %v1376 = vadd.f32 %v1184, %v1375
          %v1377 = vpop.f32.mrf.mxu0
          %1378 = vmatprep.mubr.bf16.mxu0 0
          %1379 = vmatmul.mubr.bf16.gmra.mxu0 %v1252
          %v1380 = vpop.f32.mrf.mxu0
          %v1381 = vadd.f32 %v1184, %v1380
          %v1382 = vpop.f32.mrf.mxu0
          %v1383 = vpop.f32.mrf.mxu0
          %v1384 = vadd.f32 %v1184, %v1383
          %v1385 = vpop.f32.mrf.mxu0
          %1386 = vmatprep.mubr.bf16.mxu0 0
          %1387 = vmatmul.mubr.bf16.gmra.mxu0 %v1253
          %v1388 = vpop.f32.mrf.mxu0
          %v1389 = vadd.f32 %v1184, %v1388
          %v1390 = vpop.f32.mrf.mxu0
          %v1391 = vpop.f32.mrf.mxu0
          %v1392 = vadd.f32 %v1184, %v1391
          %v1393 = vpop.f32.mrf.mxu0
          %1394 = vmatprep.mubr.bf16.mxu0 0
          %1395 = vmatmul.mubr.bf16.gmra.mxu0 %v1254
          %v1396 = vpop.f32.mrf.mxu0
          %v1397 = vadd.f32 %v1184, %v1396
          %v1398 = vpop.f32.mrf.mxu0
          %v1399 = vpop.f32.mrf.mxu0
          %v1400 = vadd.f32 %v1184, %v1399
          %v1401 = vpop.f32.mrf.mxu0
          %1402 = vmatprep.mubr.bf16.mxu0 0
          %1403 = vmatmul.mubr.bf16.gmra.mxu0 %v1255
          %v1404 = vpop.f32.mrf.mxu0
          %v1405 = vadd.f32 %v1184, %v1404
          %v1406 = vpop.f32.mrf.mxu0
          %v1407 = vpop.f32.mrf.mxu0
          %v1408 = vadd.f32 %v1184, %v1407
          %v1409 = vpop.f32.mrf.mxu0
          %1410 = vmatprep.mubr.bf16.mxu0 0
          %1411 = vmatmul.mubr.bf16.gmra.mxu0 %v1256
          %v1412 = vpop.f32.mrf.mxu0
          %v1413 = vadd.f32 %v1184, %v1412
          %v1414 = vpop.f32.mrf.mxu0
          %v1415 = vpop.f32.mrf.mxu0
          %v1416 = vadd.f32 %v1184, %v1415
          %v1417 = vpop.f32.mrf.mxu0
          %1418 = vmatprep.mubr.bf16.mxu0 0
          %1419 = vmatmul.mubr.bf16.gmra.mxu0 %v1257
          %v1420 = vpop.f32.mrf.mxu0
          %v1421 = vadd.f32 %v1184, %v1420
          %v1422 = vpop.f32.mrf.mxu0
          %v1423 = vpop.f32.mrf.mxu0
          %v1424 = vadd.f32 %v1184, %v1423
          %v1425 = vpop.f32.mrf.mxu0
          %1426 = vmatprep.mubr.bf16.mxu0 0
          %1427 = vmatmul.mubr.bf16.gmra.mxu0 %v1258
          %v1428 = vpop.f32.mrf.mxu0
          %v1429 = vadd.f32 %v1184, %v1428
          %v1430 = vpop.f32.mrf.mxu0
          %v1431 = vpop.f32.mrf.mxu0
          %v1432 = vadd.f32 %v1184, %v1431
          %v1433 = vpop.f32.mrf.mxu0
          %1434 = vmatprep.mubr.bf16.mxu0 0
          %1435 = vmatmul.mubr.bf16.gmra.mxu0 %v1259
          %v1436 = vpop.f32.mrf.mxu0
          %v1437 = vadd.f32 %v1184, %v1436
          %v1438 = vpop.f32.mrf.mxu0
          %v1439 = vpop.f32.mrf.mxu0
          %v1440 = vadd.f32 %v1184, %v1439
          %v1441 = vpop.f32.mrf.mxu0
          %1442 = vmatprep.mubr.bf16.mxu0 0
          %1443 = vmatmul.mubr.bf16.gmra.mxu0 %v1260
          %v1444 = vpop.f32.mrf.mxu0
          %v1445 = vadd.f32 %v1184, %v1444
          %v1446 = vpop.f32.mrf.mxu0
          %v1447 = vpop.f32.mrf.mxu0
          %v1448 = vadd.f32 %v1184, %v1447
          %v1449 = vpop.f32.mrf.mxu0
          %1450 = vmatprep.mubr.bf16.mxu0 0
          %1451 = vmatmul.mubr.bf16.gmra.mxu0 %v1261
          %v1452 = vpop.f32.mrf.mxu0
          %v1453 = vadd.f32 %v1184, %v1452
          %v1454 = vpop.f32.mrf.mxu0
          %v1455 = vpop.f32.mrf.mxu0
          %v1456 = vadd.f32 %v1184, %v1455
          %v1457 = vpop.f32.mrf.mxu0
          %1458 = vmatprep.mubr.bf16.mxu0 0
          %1459 = vmatmul.mubr.bf16.gmra.mxu0 %v1262
          %v1460 = vpop.f32.mrf.mxu0
          %v1461 = vadd.f32 %v1184, %v1460
          %v1462 = vpop.f32.mrf.mxu0
          %v1463 = vpop.f32.mrf.mxu0
          %v1464 = vadd.f32 %v1184, %v1463
          %v1465 = vpop.f32.mrf.mxu0
          %1466 = vmatprep.mubr.bf16.mxu0 0
          %1467 = vmatmul.mubr.bf16.gmra.mxu0 %v1263
          %v1468 = vpop.f32.mrf.mxu0
          %v1469 = vadd.f32 %v1184, %v1468
          %v1470 = vpop.f32.mrf.mxu0
          %v1471 = vpop.f32.mrf.mxu0
          %v1472 = vadd.f32 %v1184, %v1471
          %v1473 = vpop.f32.mrf.mxu0
          %1474 = vmatprep.mubr.bf16.mxu0 0
          %1475 = vmatmul.mubr.bf16.gmra.mxu0 %v1264
          %v1476 = vpop.f32.mrf.mxu0
          %v1477 = vadd.f32 %v1184, %v1476
          %v1478 = vpop.f32.mrf.mxu0
          %v1479 = vpop.f32.mrf.mxu0
          %v1480 = vadd.f32 %v1184, %v1479
          %v1481 = vpop.f32.mrf.mxu0
          %1482 = vmatprep.mubr.bf16.mxu0 0
          %1483 = vmatmul.mubr.bf16.gmra.mxu0 %v1265
          %v1484 = vpop.f32.mrf.mxu0
          %v1485 = vadd.f32 %v1184, %v1484
          %v1486 = vpop.f32.mrf.mxu0
          %v1487 = vpop.f32.mrf.mxu0
          %v1488 = vadd.f32 %v1184, %v1487
          %v1489 = vpop.f32.mrf.mxu0
          %1490 = vdwg.mxu0
          %v1491 = vmax.f32 %v1365, 0.0
          %v1492 = vmax.f32 %v1368, 0.0
          %v1493 = vmax.f32 %v1373, 0.0
          %v1494 = vmax.f32 %v1376, 0.0
          %v1495 = vmax.f32 %v1381, 0.0
          %v1496 = vmax.f32 %v1384, 0.0
          %v1497 = vmax.f32 %v1389, 0.0
          %v1498 = vmax.f32 %v1392, 0.0
          %v1499 = vmax.f32 %v1397, 0.0
          %v1500 = vmax.f32 %v1400, 0.0
          %v1501 = vmax.f32 %v1405, 0.0
          %v1502 = vmax.f32 %v1408, 0.0
          %v1503 = vmax.f32 %v1413, 0.0
          %v1504 = vmax.f32 %v1416, 0.0
          %v1505 = vmax.f32 %v1421, 0.0
          %v1506 = vmax.f32 %v1424, 0.0
          %v1507 = vmax.f32 %v1429, 0.0
          %v1508 = vmax.f32 %v1432, 0.0
          %v1509 = vmax.f32 %v1437, 0.0
          %v1510 = vmax.f32 %v1440, 0.0
          %v1511 = vmax.f32 %v1445, 0.0
          %v1512 = vmax.f32 %v1448, 0.0
          %v1513 = vmax.f32 %v1453, 0.0
          %v1514 = vmax.f32 %v1456, 0.0
          %v1515 = vmax.f32 %v1461, 0.0
          %v1516 = vmax.f32 %v1464, 0.0
          %v1517 = vmax.f32 %v1469, 0.0
          %v1518 = vmax.f32 %v1472, 0.0
          %v1519 = vmax.f32 %v1477, 0.0
          %v1520 = vmax.f32 %v1480, 0.0
          %v1521 = vmax.f32 %v1485, 0.0
          %v1522 = vmax.f32 %v1488, 0.0
          %1523 = vst [vmem:[%s475] sm:$0xff] %v1491
          %1524 = vst [vmem:[%s475 + $0x8] sm:$0xff] %v1492
          %1525 = vst [vmem:[%s475 + $0x10] sm:$0xff] %v1493
          %1526 = vst [vmem:[%s475 + $0x18] sm:$0xff] %v1494
          %1527 = vst [vmem:[%s475 + $0x20] sm:$0xff] %v1495
          %1528 = vst [vmem:[%s475 + $0x28] sm:$0xff] %v1496
          %1529 = vst [vmem:[%s475 + $0x30] sm:$0xff] %v1497
          %1530 = vst [vmem:[%s475 + $0x38] sm:$0xff] %v1498
          %1531 = vst [vmem:[%s475 + $0x40] sm:$0xff] %v1499
          %1532 = vst [vmem:[%s475 + $0x48] sm:$0xff] %v1500
          %1533 = vst [vmem:[%s475 + $0x50] sm:$0xff] %v1501
          %1534 = vst [vmem:[%s475 + $0x58] sm:$0xff] %v1502
          %1535 = vst [vmem:[%s475 + $0x60] sm:$0xff] %v1503
          %1536 = vst [vmem:[%s475 + $0x68] sm:$0xff] %v1504
          %1537 = vst [vmem:[%s475 + $0x70] sm:$0xff] %v1505
          %1538 = vst [vmem:[%s475 + $0x78] sm:$0xff] %v1506
          %1539 = vst [vmem:[%s475 + $0x80] sm:$0xff] %v1507
          %1540 = vst [vmem:[%s475 + $0x88] sm:$0xff] %v1508
          %1541 = vst [vmem:[%s475 + $0x90] sm:$0xff] %v1509
          %1542 = vst [vmem:[%s475 + $0x98] sm:$0xff] %v1510
          %1543 = vst [vmem:[%s475 + $0xa0] sm:$0xff] %v1511
          %1544 = vst [vmem:[%s475 + $0xa8] sm:$0xff] %v1512
          %1545 = vst [vmem:[%s475 + $0xb0] sm:$0xff] %v1513
          %1546 = vst [vmem:[%s475 + $0xb8] sm:$0xff] %v1514
          %1547 = vst [vmem:[%s475 + $0xc0] sm:$0xff] %v1515
          %1548 = vst [vmem:[%s475 + $0xc8] sm:$0xff] %v1516
          %1549 = vst [vmem:[%s475 + $0xd0] sm:$0xff] %v1517
          %1550 = vst [vmem:[%s475 + $0xd8] sm:$0xff] %v1518
          %1551 = vst [vmem:[%s475 + $0xe0] sm:$0xff] %v1519
          %1552 = vst [vmem:[%s475 + $0xe8] sm:$0xff] %v1520
          %1553 = vst [vmem:[%s475 + $0xf0] sm:$0xff] %v1521
          %1554 = vst [vmem:[%s475 + $0xf8] sm:$0xff] %v1522
          %v1555 = vpack.c.bf16 %v1492, %v1491
          %v1556 = vpack.c.bf16 %v1494, %v1493
          %v1557 = vpack.c.bf16 %v1496, %v1495
          %v1558 = vpack.c.bf16 %v1498, %v1497
          %v1559 = vpack.c.bf16 %v1500, %v1499
          %v1560 = vpack.c.bf16 %v1502, %v1501
          %v1561 = vpack.c.bf16 %v1504, %v1503
          %v1562 = vpack.c.bf16 %v1506, %v1505
          %v1563 = vpack.c.bf16 %v1508, %v1507
          %v1564 = vpack.c.bf16 %v1510, %v1509
          %v1565 = vpack.c.bf16 %v1512, %v1511
          %v1566 = vpack.c.bf16 %v1514, %v1513
          %v1567 = vpack.c.bf16 %v1516, %v1515
          %v1568 = vpack.c.bf16 %v1518, %v1517
          %v1569 = vpack.c.bf16 %v1520, %v1519
          %v1570 = vpack.c.bf16 %v1522, %v1521
          %v1587 = vunpack.c.l.b16 %v1555
          %v1588 = vunpack.c.h.b16 %v1555
          %v1589 = vunpack.c.l.b16 %v1556
          %v1590 = vunpack.c.h.b16 %v1556
          %v1591 = vunpack.c.l.b16 %v1557
          %v1592 = vunpack.c.h.b16 %v1557
          %v1593 = vunpack.c.l.b16 %v1558
          %v1594 = vunpack.c.h.b16 %v1558
          %v1595 = vunpack.c.l.b16 %v1559
          %v1596 = vunpack.c.h.b16 %v1559
          %v1597 = vunpack.c.l.b16 %v1560
          %v1598 = vunpack.c.h.b16 %v1560
          %v1599 = vunpack.c.l.b16 %v1561
          %v1600 = vunpack.c.h.b16 %v1561
          %v1601 = vunpack.c.l.b16 %v1562
          %v1602 = vunpack.c.h.b16 %v1562
          %v1603 = vunpack.c.l.b16 %v1563
          %v1604 = vunpack.c.h.b16 %v1563
          %v1605 = vunpack.c.l.b16 %v1564
          %v1606 = vunpack.c.h.b16 %v1564
          %v1607 = vunpack.c.l.b16 %v1565
          %v1608 = vunpack.c.h.b16 %v1565
          %v1609 = vunpack.c.l.b16 %v1566
          %v1610 = vunpack.c.h.b16 %v1566
          %v1611 = vunpack.c.l.b16 %v1567
          %v1612 = vunpack.c.h.b16 %v1567
          %v1613 = vunpack.c.l.b16 %v1568
          %v1614 = vunpack.c.h.b16 %v1568
          %v1615 = vunpack.c.l.b16 %v1569
          %v1616 = vunpack.c.h.b16 %v1569
          %v1617 = vunpack.c.l.b16 %v1570
          %v1618 = vunpack.c.h.b16 %v1570
          %v1619 = vpack.c.b16 %v1587, %v1587
          %v1620 = vpack.c.b16 %v1588, %v1588
          %v1621 = vpack.c.b16 %v1589, %v1589
          %v1622 = vpack.c.b16 %v1590, %v1590
          %v1623 = vpack.c.b16 %v1591, %v1591
          %v1624 = vpack.c.b16 %v1592, %v1592
          %v1625 = vpack.c.b16 %v1593, %v1593
          %v1626 = vpack.c.b16 %v1594, %v1594
          %v1627 = vpack.c.b16 %v1595, %v1595
          %v1628 = vpack.c.b16 %v1596, %v1596
          %v1629 = vpack.c.b16 %v1597, %v1597
          %v1630 = vpack.c.b16 %v1598, %v1598
          %v1631 = vpack.c.b16 %v1599, %v1599
          %v1632 = vpack.c.b16 %v1600, %v1600
          %v1633 = vpack.c.b16 %v1601, %v1601
          %v1634 = vpack.c.b16 %v1602, %v1602
          %v1635 = vpack.c.b16 %v1603, %v1603
          %v1636 = vpack.c.b16 %v1604, %v1604
          %v1637 = vpack.c.b16 %v1605, %v1605
          %v1638 = vpack.c.b16 %v1606, %v1606
          %v1639 = vpack.c.b16 %v1607, %v1607
          %v1640 = vpack.c.b16 %v1608, %v1608
          %v1641 = vpack.c.b16 %v1609, %v1609
          %v1642 = vpack.c.b16 %v1610, %v1610
          %v1643 = vpack.c.b16 %v1611, %v1611
          %v1644 = vpack.c.b16 %v1612, %v1612
          %v1645 = vpack.c.b16 %v1613, %v1613
          %v1646 = vpack.c.b16 %v1614, %v1614
          %v1647 = vpack.c.b16 %v1615, %v1615
          %v1648 = vpack.c.b16 %v1616, %v1616
          %v1649 = vpack.c.b16 %v1617, %v1617
          %v1650 = vpack.c.b16 %v1618, %v1618
          %1683 = vst [vmem:[%s482] sm:$0xf] %v1619
          %1684 = vst [vmem:[%s482 + $0x4] sm:$0xf] %v1620
          %1685 = vst [vmem:[%s482 + $0x8] sm:$0xf] %v1621
          %1686 = vst [vmem:[%s482 + $0xc] sm:$0xf] %v1622
          %1687 = vst [vmem:[%s482 + $0x10] sm:$0xf] %v1623
          %1688 = vst [vmem:[%s482 + $0x14] sm:$0xf] %v1624
          %1689 = vst [vmem:[%s482 + $0x18] sm:$0xf] %v1625
          %1690 = vst [vmem:[%s482 + $0x1c] sm:$0xf] %v1626
          %1691 = vst [vmem:[%s482 + $0x20] sm:$0xf] %v1627
          %1692 = vst [vmem:[%s482 + $0x24] sm:$0xf] %v1628
          %1693 = vst [vmem:[%s482 + $0x28] sm:$0xf] %v1629
          %1694 = vst [vmem:[%s482 + $0x2c] sm:$0xf] %v1630
          %1695 = vst [vmem:[%s482 + $0x30] sm:$0xf] %v1631
          %1696 = vst [vmem:[%s482 + $0x34] sm:$0xf] %v1632
          %1697 = vst [vmem:[%s482 + $0x38] sm:$0xf] %v1633
          %1698 = vst [vmem:[%s482 + $0x3c] sm:$0xf] %v1634
          %1699 = vst [vmem:[%s482 + $0x40] sm:$0xf] %v1635
          %1700 = vst [vmem:[%s482 + $0x44] sm:$0xf] %v1636
          %1701 = vst [vmem:[%s482 + $0x48] sm:$0xf] %v1637
          %1702 = vst [vmem:[%s482 + $0x4c] sm:$0xf] %v1638
          %1703 = vst [vmem:[%s482 + $0x50] sm:$0xf] %v1639
          %1704 = vst [vmem:[%s482 + $0x54] sm:$0xf] %v1640
          %1705 = vst [vmem:[%s482 + $0x58] sm:$0xf] %v1641
          %1706 = vst [vmem:[%s482 + $0x5c] sm:$0xf] %v1642
          %1707 = vst [vmem:[%s482 + $0x60] sm:$0xf] %v1643
          %1708 = vst [vmem:[%s482 + $0x64] sm:$0xf] %v1644
          %1709 = vst [vmem:[%s482 + $0x68] sm:$0xf] %v1645
          %1710 = vst [vmem:[%s482 + $0x6c] sm:$0xf] %v1646
          %1711 = vst [vmem:[%s482 + $0x70] sm:$0xf] %v1647
          %1712 = vst [vmem:[%s482 + $0x74] sm:$0xf] %v1648
          %1713 = vst [vmem:[%s482 + $0x78] sm:$0xf] %v1649
          %1714 = vst [vmem:[%s482 + $0x7c] sm:$0xf] %v1650
          %v1715 = vld [vmem:[%s508] sm:$0xff]
          %v1716 = vld [vmem:[%s508 + $0x8] sm:$0xff]
          %v1717 = vld [vmem:[%s508 + $0x10] sm:$0xff]
          %v1718 = vld [vmem:[%s508 + $0x18] sm:$0xff]
          %v1719 = vld [vmem:[%s508 + $0x20] sm:$0xff]
          %v1720 = vld [vmem:[%s508 + $0x28] sm:$0xff]
          %v1721 = vld [vmem:[%s508 + $0x30] sm:$0xff]
          %v1722 = vld [vmem:[%s508 + $0x38] sm:$0xff]
          %v1723 = vld [vmem:[%s508 + $0x40] sm:$0xff]
          %v1724 = vld [vmem:[%s508 + $0x48] sm:$0xff]
          %v1725 = vld [vmem:[%s508 + $0x50] sm:$0xff]
          %v1726 = vld [vmem:[%s508 + $0x58] sm:$0xff]
          %v1727 = vld [vmem:[%s508 + $0x60] sm:$0xff]
          %v1728 = vld [vmem:[%s508 + $0x68] sm:$0xff]
          %v1729 = vld [vmem:[%s508 + $0x70] sm:$0xff]
          %v1730 = vld [vmem:[%s508 + $0x78] sm:$0xff]
          %v1731 = vld [vmem:[%s508 + $0x80] sm:$0xff]
          %v1732 = vld [vmem:[%s508 + $0x88] sm:$0xff]
          %v1733 = vld [vmem:[%s508 + $0x90] sm:$0xff]
          %v1734 = vld [vmem:[%s508 + $0x98] sm:$0xff]
          %v1735 = vld [vmem:[%s508 + $0xa0] sm:$0xff]
          %v1736 = vld [vmem:[%s508 + $0xa8] sm:$0xff]
          %v1737 = vld [vmem:[%s508 + $0xb0] sm:$0xff]
          %v1738 = vld [vmem:[%s508 + $0xb8] sm:$0xff]
          %v1739 = vld [vmem:[%s508 + $0xc0] sm:$0xff]
          %v1740 = vld [vmem:[%s508 + $0xc8] sm:$0xff]
          %v1741 = vld [vmem:[%s508 + $0xd0] sm:$0xff]
          %v1742 = vld [vmem:[%s508 + $0xd8] sm:$0xff]
          %v1743 = vld [vmem:[%s508 + $0xe0] sm:$0xff]
          %v1744 = vld [vmem:[%s508 + $0xe8] sm:$0xff]
          %v1745 = vld [vmem:[%s508 + $0xf0] sm:$0xff]
          %v1746 = vld [vmem:[%s508 + $0xf8] sm:$0xff]
          %v1747 = vunpack.c.l.bf16 %v1131
          %v1748 = vunpack.c.l.bf16 %v1132
          %v1749 = vunpack.c.l.bf16 %v1133
          %v1750 = vunpack.c.l.bf16 %v1134
          %v1751 = vunpack.c.l.bf16 %v1135
          %v1752 = vunpack.c.l.bf16 %v1136
          %v1753 = vunpack.c.l.bf16 %v1137
          %v1754 = vunpack.c.l.bf16 %v1138
          %v1755 = vunpack.c.l.bf16 %v1139
          %v1756 = vunpack.c.l.bf16 %v1140
          %v1757 = vunpack.c.l.bf16 %v1141
          %v1758 = vunpack.c.l.bf16 %v1142
          %v1759 = vunpack.c.l.bf16 %v1143
          %v1760 = vunpack.c.l.bf16 %v1144
          %v1761 = vunpack.c.l.bf16 %v1145
          %v1762 = vunpack.c.l.bf16 %v1146
          %v1763 = vunpack.c.l.bf16 %v1147
          %v1764 = vunpack.c.l.bf16 %v1148
          %v1765 = vunpack.c.l.bf16 %v1149
          %v1766 = vunpack.c.l.bf16 %v1150
          %v1767 = vunpack.c.l.bf16 %v1151
          %v1768 = vunpack.c.l.bf16 %v1152
          %v1769 = vunpack.c.l.bf16 %v1153
          %v1770 = vunpack.c.l.bf16 %v1154
          %v1771 = vunpack.c.l.bf16 %v1155
          %v1772 = vunpack.c.l.bf16 %v1156
          %v1773 = vunpack.c.l.bf16 %v1157
          %v1774 = vunpack.c.l.bf16 %v1158
          %v1775 = vunpack.c.l.bf16 %v1159
          %v1776 = vunpack.c.l.bf16 %v1160
          %v1777 = vunpack.c.l.bf16 %v1161
          %v1778 = vunpack.c.l.bf16 %v1162
          %1780 = vset.pattern.permute.xlu0 0
          %1781 = vperm.xlu0 %1780, %v1715
          %v1782 = vpop.permute.xlu0 %1781
          %1785 = vset.pattern.permute.xlu0 0
          %1786 = vperm.xlu0 %1785, %v1716
          %v1787 = vpop.permute.xlu0 %1786
          %1790 = vset.pattern.permute.xlu0 0
          %1791 = vperm.xlu0 %1790, %v1717
          %v1792 = vpop.permute.xlu0 %1791
          %1795 = vset.pattern.permute.xlu0 0
          %1796 = vperm.xlu0 %1795, %v1718
          %v1797 = vpop.permute.xlu0 %1796
          %1800 = vset.pattern.permute.xlu0 0
          %1801 = vperm.xlu0 %1800, %v1719
          %v1802 = vpop.permute.xlu0 %1801
          %1805 = vset.pattern.permute.xlu0 0
          %1806 = vperm.xlu0 %1805, %v1720
          %v1807 = vpop.permute.xlu0 %1806
          %1810 = vset.pattern.permute.xlu0 0
          %1811 = vperm.xlu0 %1810, %v1721
          %v1812 = vpop.permute.xlu0 %1811
          %1815 = vset.pattern.permute.xlu0 0
          %1816 = vperm.xlu0 %1815, %v1722
          %v1817 = vpop.permute.xlu0 %1816
          %1820 = vset.pattern.permute.xlu0 0
          %1821 = vperm.xlu0 %1820, %v1723
          %v1822 = vpop.permute.xlu0 %1821
          %1825 = vset.pattern.permute.xlu0 0
          %1826 = vperm.xlu0 %1825, %v1724
          %v1827 = vpop.permute.xlu0 %1826
          %1830 = vset.pattern.permute.xlu0 0
          %1831 = vperm.xlu0 %1830, %v1725
          %v1832 = vpop.permute.xlu0 %1831
          %1835 = vset.pattern.permute.xlu0 0
          %1836 = vperm.xlu0 %1835, %v1726
          %v1837 = vpop.permute.xlu0 %1836
          %1840 = vset.pattern.permute.xlu0 0
          %1841 = vperm.xlu0 %1840, %v1727
          %v1842 = vpop.permute.xlu0 %1841
          %1845 = vset.pattern.permute.xlu0 0
          %1846 = vperm.xlu0 %1845, %v1728
          %v1847 = vpop.permute.xlu0 %1846
          %1850 = vset.pattern.permute.xlu0 0
          %1851 = vperm.xlu0 %1850, %v1729
          %v1852 = vpop.permute.xlu0 %1851
          %1855 = vset.pattern.permute.xlu0 0
          %1856 = vperm.xlu0 %1855, %v1730
          %v1857 = vpop.permute.xlu0 %1856
          %1860 = vset.pattern.permute.xlu0 0
          %1861 = vperm.xlu0 %1860, %v1731
          %v1862 = vpop.permute.xlu0 %1861
          %1865 = vset.pattern.permute.xlu0 0
          %1866 = vperm.xlu0 %1865, %v1732
          %v1867 = vpop.permute.xlu0 %1866
          %1870 = vset.pattern.permute.xlu0 0
          %1871 = vperm.xlu0 %1870, %v1733
          %v1872 = vpop.permute.xlu0 %1871
          %1875 = vset.pattern.permute.xlu0 0
          %1876 = vperm.xlu0 %1875, %v1734
          %v1877 = vpop.permute.xlu0 %1876
          %1880 = vset.pattern.permute.xlu0 0
          %1881 = vperm.xlu0 %1880, %v1735
          %v1882 = vpop.permute.xlu0 %1881
          %1885 = vset.pattern.permute.xlu0 0
          %1886 = vperm.xlu0 %1885, %v1736
          %v1887 = vpop.permute.xlu0 %1886
          %1890 = vset.pattern.permute.xlu0 0
          %1891 = vperm.xlu0 %1890, %v1737
          %v1892 = vpop.permute.xlu0 %1891
          %1895 = vset.pattern.permute.xlu0 0
          %1896 = vperm.xlu0 %1895, %v1738
          %v1897 = vpop.permute.xlu0 %1896
          %1900 = vset.pattern.permute.xlu0 0
          %1901 = vperm.xlu0 %1900, %v1739
          %v1902 = vpop.permute.xlu0 %1901
          %1905 = vset.pattern.permute.xlu0 0
          %1906 = vperm.xlu0 %1905, %v1740
          %v1907 = vpop.permute.xlu0 %1906
          %1910 = vset.pattern.permute.xlu0 0
          %1911 = vperm.xlu0 %1910, %v1741
          %v1912 = vpop.permute.xlu0 %1911
          %1915 = vset.pattern.permute.xlu0 0
          %1916 = vperm.xlu0 %1915, %v1742
          %v1917 = vpop.permute.xlu0 %1916
          %1920 = vset.pattern.permute.xlu0 0
          %1921 = vperm.xlu0 %1920, %v1743
          %v1922 = vpop.permute.xlu0 %1921
          %1925 = vset.pattern.permute.xlu0 0
          %1926 = vperm.xlu0 %1925, %v1744
          %v1927 = vpop.permute.xlu0 %1926
          %1930 = vset.pattern.permute.xlu0 0
          %1931 = vperm.xlu0 %1930, %v1745
          %v1932 = vpop.permute.xlu0 %1931
          %1935 = vset.pattern.permute.xlu0 0
          %1936 = vperm.xlu0 %1935, %v1746
          %v1937 = vpop.permute.xlu0 %1936
          %v1939 = vmul.f32 %v1782, %v1747
          %v1940 = vmul.f32 %v1787, %v1748
          %v1941 = vmul.f32 %v1792, %v1749
          %v1942 = vmul.f32 %v1797, %v1750
          %v1943 = vmul.f32 %v1802, %v1751
          %v1944 = vmul.f32 %v1807, %v1752
          %v1945 = vmul.f32 %v1812, %v1753
          %v1946 = vmul.f32 %v1817, %v1754
          %v1947 = vmul.f32 %v1822, %v1755
          %v1948 = vmul.f32 %v1827, %v1756
          %v1949 = vmul.f32 %v1832, %v1757
          %v1950 = vmul.f32 %v1837, %v1758
          %v1951 = vmul.f32 %v1842, %v1759
          %v1952 = vmul.f32 %v1847, %v1760
          %v1953 = vmul.f32 %v1852, %v1761
          %v1954 = vmul.f32 %v1857, %v1762
          %v1955 = vmul.f32 %v1862, %v1763
          %v1956 = vmul.f32 %v1867, %v1764
          %v1957 = vmul.f32 %v1872, %v1765
          %v1958 = vmul.f32 %v1877, %v1766
          %v1959 = vmul.f32 %v1882, %v1767
          %v1960 = vmul.f32 %v1887, %v1768
          %v1961 = vmul.f32 %v1892, %v1769
          %v1962 = vmul.f32 %v1897, %v1770
          %v1963 = vmul.f32 %v1902, %v1771
          %v1964 = vmul.f32 %v1907, %v1772
          %v1965 = vmul.f32 %v1912, %v1773
          %v1966 = vmul.f32 %v1917, %v1774
          %v1967 = vmul.f32 %v1922, %v1775
          %v1968 = vmul.f32 %v1927, %v1776
          %v1969 = vmul.f32 %v1932, %v1777
          %v1970 = vmul.f32 %v1937, %v1778
          %v1971 = vld [vmem:[#allocation2] sm:$0xff]
          %v1972 = vld [vmem:[#allocation2 + $0x8] sm:$0xff]
          %v1973 = vld [vmem:[#allocation2 + $0x10] sm:$0xff]
          %v1974 = vld [vmem:[#allocation2 + $0x18] sm:$0xff]
          %v1975 = vld [vmem:[#allocation2 + $0x20] sm:$0xff]
          %v1976 = vld [vmem:[#allocation2 + $0x28] sm:$0xff]
          %v1977 = vld [vmem:[#allocation2 + $0x30] sm:$0xff]
          %v1978 = vld [vmem:[#allocation2 + $0x38] sm:$0xff]
          %v1979 = vld [vmem:[#allocation2 + $0x40] sm:$0xff]
          %v1980 = vld [vmem:[#allocation2 + $0x48] sm:$0xff]
          %v1981 = vld [vmem:[#allocation2 + $0x50] sm:$0xff]
          %v1982 = vld [vmem:[#allocation2 + $0x58] sm:$0xff]
          %v1983 = vld [vmem:[#allocation2 + $0x60] sm:$0xff]
          %v1984 = vld [vmem:[#allocation2 + $0x68] sm:$0xff]
          %v1985 = vld [vmem:[#allocation2 + $0x70] sm:$0xff]
          %v1986 = vld [vmem:[#allocation2 + $0x78] sm:$0xff]
          %v1987 = vld [vmem:[#allocation2 + $0x80] sm:$0xff]
          %v1988 = vld [vmem:[#allocation2 + $0x88] sm:$0xff]
          %v1989 = vld [vmem:[#allocation2 + $0x90] sm:$0xff]
          %v1990 = vld [vmem:[#allocation2 + $0x98] sm:$0xff]
          %v1991 = vld [vmem:[#allocation2 + $0xa0] sm:$0xff]
          %v1992 = vld [vmem:[#allocation2 + $0xa8] sm:$0xff]
          %v1993 = vld [vmem:[#allocation2 + $0xb0] sm:$0xff]
          %v1994 = vld [vmem:[#allocation2 + $0xb8] sm:$0xff]
          %v1995 = vld [vmem:[#allocation2 + $0xc0] sm:$0xff]
          %v1996 = vld [vmem:[#allocation2 + $0xc8] sm:$0xff]
          %v1997 = vld [vmem:[#allocation2 + $0xd0] sm:$0xff]
          %v1998 = vld [vmem:[#allocation2 + $0xd8] sm:$0xff]
          %v1999 = vld [vmem:[#allocation2 + $0xe0] sm:$0xff]
          %v2000 = vld [vmem:[#allocation2 + $0xe8] sm:$0xff]
          %v2001 = vld [vmem:[#allocation2 + $0xf0] sm:$0xff]
          %v2002 = vld [vmem:[#allocation2 + $0xf8] sm:$0xff]
          %v2003 = vsub.f32 %v1939, %v1971
          %v2004 = vsub.f32 %v1940, %v1972
          %v2005 = vsub.f32 %v1941, %v1973
          %v2006 = vsub.f32 %v1942, %v1974
          %v2007 = vsub.f32 %v1943, %v1975
          %v2008 = vsub.f32 %v1944, %v1976
          %v2009 = vsub.f32 %v1945, %v1977
          %v2010 = vsub.f32 %v1946, %v1978
          %v2011 = vsub.f32 %v1947, %v1979
          %v2012 = vsub.f32 %v1948, %v1980
          %v2013 = vsub.f32 %v1949, %v1981
          %v2014 = vsub.f32 %v1950, %v1982
          %v2015 = vsub.f32 %v1951, %v1983
          %v2016 = vsub.f32 %v1952, %v1984
          %v2017 = vsub.f32 %v1953, %v1985
          %v2018 = vsub.f32 %v1954, %v1986
          %v2019 = vsub.f32 %v1955, %v1987
          %v2020 = vsub.f32 %v1956, %v1988
          %v2021 = vsub.f32 %v1957, %v1989
          %v2022 = vsub.f32 %v1958, %v1990
          %v2023 = vsub.f32 %v1959, %v1991
          %v2024 = vsub.f32 %v1960, %v1992
          %v2025 = vsub.f32 %v1961, %v1993
          %v2026 = vsub.f32 %v1962, %v1994
          %v2027 = vsub.f32 %v1963, %v1995
          %v2028 = vsub.f32 %v1964, %v1996
          %v2029 = vsub.f32 %v1965, %v1997
          %v2030 = vsub.f32 %v1966, %v1998
          %v2031 = vsub.f32 %v1967, %v1999
          %v2032 = vsub.f32 %v1968, %v2000
          %v2033 = vsub.f32 %v1969, %v2001
          %v2034 = vsub.f32 %v1970, %v2002
          %v2035 = vpack.c.bf16 %v2004, %v2003
          %v2036 = vpack.c.bf16 %v2006, %v2005
          %v2037 = vpack.c.bf16 %v2008, %v2007
          %v2038 = vpack.c.bf16 %v2010, %v2009
          %v2039 = vpack.c.bf16 %v2012, %v2011
          %v2040 = vpack.c.bf16 %v2014, %v2013
          %v2041 = vpack.c.bf16 %v2016, %v2015
          %v2042 = vpack.c.bf16 %v2018, %v2017
          %v2043 = vpack.c.bf16 %v2020, %v2019
          %v2044 = vpack.c.bf16 %v2022, %v2021
          %v2045 = vpack.c.bf16 %v2024, %v2023
          %v2046 = vpack.c.bf16 %v2026, %v2025
          %v2047 = vpack.c.bf16 %v2028, %v2027
          %v2048 = vpack.c.bf16 %v2030, %v2029
          %v2049 = vpack.c.bf16 %v2032, %v2031
          %v2050 = vpack.c.bf16 %v2034, %v2033
          %v2051 = vld [vmem:[#allocation8] sm:$0xf]
          %v2052 = vld [vmem:[#allocation8 + $0x4] sm:$0xf]
          %v2053 = vld [vmem:[#allocation8 + $0x8] sm:$0xf]
          %v2054 = vld [vmem:[#allocation8 + $0xc] sm:$0xf]
          %v2055 = vld [vmem:[#allocation8 + $0x10] sm:$0xf]
          %v2056 = vld [vmem:[#allocation8 + $0x14] sm:$0xf]
          %v2057 = vld [vmem:[#allocation8 + $0x18] sm:$0xf]
          %v2058 = vld [vmem:[#allocation8 + $0x1c] sm:$0xf]
          %v2059 = vld [vmem:[#allocation8 + $0x20] sm:$0xf]
          %v2060 = vld [vmem:[#allocation8 + $0x24] sm:$0xf]
          %v2061 = vld [vmem:[#allocation8 + $0x28] sm:$0xf]
          %v2062 = vld [vmem:[#allocation8 + $0x2c] sm:$0xf]
          %v2063 = vld [vmem:[#allocation8 + $0x30] sm:$0xf]
          %v2064 = vld [vmem:[#allocation8 + $0x34] sm:$0xf]
          %v2065 = vld [vmem:[#allocation8 + $0x38] sm:$0xf]
          %v2066 = vld [vmem:[#allocation8 + $0x3c] sm:$0xf]
          %v2067 = vld [vmem:[%s7] sm:$0x1]
          %v2069 = vlaneseq
          %v2070 = vshrl.u32 %v2069, 7
          %v2071 = vsub.s32 0, %v2070
          %v2072 = vrot.slane %v2067, %v2071
          %v2090 = vunpack.c.l.b16 %v2051
          %v2091 = vunpack.c.l.b16 %v2052
          %v2092 = vunpack.c.l.b16 %v2053
          %v2093 = vunpack.c.l.b16 %v2054
          %v2094 = vunpack.c.l.b16 %v2055
          %v2095 = vunpack.c.l.b16 %v2056
          %v2096 = vunpack.c.l.b16 %v2057
          %v2097 = vunpack.c.l.b16 %v2058
          %v2098 = vunpack.c.l.b16 %v2059
          %v2099 = vunpack.c.l.b16 %v2060
          %v2100 = vunpack.c.l.b16 %v2061
          %v2101 = vunpack.c.l.b16 %v2062
          %v2102 = vunpack.c.l.b16 %v2063
          %v2103 = vunpack.c.l.b16 %v2064
          %v2104 = vunpack.c.l.b16 %v2065
          %v2105 = vunpack.c.l.b16 %v2066
          %v2106 = vpack.c.b16 %v2091, %v2090
          %v2107 = vpack.c.b16 %v2093, %v2092
          %v2108 = vpack.c.b16 %v2095, %v2094
          %v2109 = vpack.c.b16 %v2097, %v2096
          %v2110 = vpack.c.b16 %v2099, %v2098
          %v2111 = vpack.c.b16 %v2101, %v2100
          %v2112 = vpack.c.b16 %v2103, %v2102
          %v2113 = vpack.c.b16 %v2105, %v2104
          %2122 = vmatprep.subr.bf16.mxu0 0
          %2123 = vmatpush1.bf16.msra.mxu0 %v2113
          %2124 = vmatprep.subr.bf16.mxu0 0
          %2125 = vmatpush1.bf16.msra.mxu0 %v2112
          %2126 = vmatprep.subr.bf16.mxu0 0
          %2127 = vmatpush1.bf16.msra.mxu0 %v2111
          %2128 = vmatprep.subr.bf16.mxu0 0
          %2129 = vmatpush1.bf16.msra.mxu0 %v2110
          %2130 = vmatprep.subr.bf16.mxu0 0
          %2131 = vmatpush1.bf16.msra.mxu0 %v2109
          %2132 = vmatprep.subr.bf16.mxu0 0
          %2133 = vmatpush1.bf16.msra.mxu0 %v2108
          %2134 = vmatprep.subr.bf16.mxu0 0
          %2135 = vmatpush1.bf16.msra.mxu0 %v2107
          %2136 = vmatprep.subr.bf16.mxu0 0
          %2137 = vmatpush1.bf16.msra.mxu0 %v2106
          %2138 = vmatprep.subr.bf16.mxu0 0
          %2139 = vmatpush2.bf16.msra.mxu0 0
          %2140 = vmatprep.subr.bf16.mxu0 0
          %2141 = vmatpush2.bf16.msra.mxu0 0
          %2142 = vmatprep.subr.bf16.mxu0 0
          %2143 = vmatpush2.bf16.msra.mxu0 0
          %2144 = vmatprep.subr.bf16.mxu0 0
          %2145 = vmatpush2.bf16.msra.mxu0 0
          %2146 = vmatprep.subr.bf16.mxu0 0
          %2147 = vmatpush2.bf16.msra.mxu0 0
          %2148 = vmatprep.subr.bf16.mxu0 0
          %2149 = vmatpush2.bf16.msra.mxu0 0
          %2150 = vmatprep.subr.bf16.mxu0 0
          %2151 = vmatpush2.bf16.msra.mxu0 0
          %2152 = vmatprep.subr.bf16.mxu0 0
          %2153 = vmatpush2.bf16.msra.mxu0 0
          %2154 = vmatprep.mubr.bf16.mxu0 0
          %2155 = vmatmul.mubr.bf16.gmra.mxu0 %v2035
          %v2156 = vpop.f32.mrf.mxu0
          %v2157 = vadd.f32 %v2072, %v2156
          %v2158 = vpop.f32.mrf.mxu0
          %v2159 = vpop.f32.mrf.mxu0
          %v2160 = vadd.f32 %v2072, %v2159
          %v2161 = vpop.f32.mrf.mxu0
          %2162 = vmatprep.mubr.bf16.mxu0 0
          %2163 = vmatmul.mubr.bf16.gmra.mxu0 %v2036
          %v2164 = vpop.f32.mrf.mxu0
          %v2165 = vadd.f32 %v2072, %v2164
          %v2166 = vpop.f32.mrf.mxu0
          %v2167 = vpop.f32.mrf.mxu0
          %v2168 = vadd.f32 %v2072, %v2167
          %v2169 = vpop.f32.mrf.mxu0
          %2170 = vmatprep.mubr.bf16.mxu0 0
          %2171 = vmatmul.mubr.bf16.gmra.mxu0 %v2037
          %v2172 = vpop.f32.mrf.mxu0
          %v2173 = vadd.f32 %v2072, %v2172
          %v2174 = vpop.f32.mrf.mxu0
          %v2175 = vpop.f32.mrf.mxu0
          %v2176 = vadd.f32 %v2072, %v2175
          %v2177 = vpop.f32.mrf.mxu0
          %2178 = vmatprep.mubr.bf16.mxu0 0
          %2179 = vmatmul.mubr.bf16.gmra.mxu0 %v2038
          %v2180 = vpop.f32.mrf.mxu0
          %v2181 = vadd.f32 %v2072, %v2180
          %v2182 = vpop.f32.mrf.mxu0
          %v2183 = vpop.f32.mrf.mxu0
          %v2184 = vadd.f32 %v2072, %v2183
          %v2185 = vpop.f32.mrf.mxu0
          %2186 = vmatprep.mubr.bf16.mxu0 0
          %2187 = vmatmul.mubr.bf16.gmra.mxu0 %v2039
          %v2188 = vpop.f32.mrf.mxu0
          %v2189 = vadd.f32 %v2072, %v2188
          %v2190 = vpop.f32.mrf.mxu0
          %v2191 = vpop.f32.mrf.mxu0
          %v2192 = vadd.f32 %v2072, %v2191
          %v2193 = vpop.f32.mrf.mxu0
          %2194 = vmatprep.mubr.bf16.mxu0 0
          %2195 = vmatmul.mubr.bf16.gmra.mxu0 %v2040
          %v2196 = vpop.f32.mrf.mxu0
          %v2197 = vadd.f32 %v2072, %v2196
          %v2198 = vpop.f32.mrf.mxu0
          %v2199 = vpop.f32.mrf.mxu0
          %v2200 = vadd.f32 %v2072, %v2199
          %v2201 = vpop.f32.mrf.mxu0
          %2202 = vmatprep.mubr.bf16.mxu0 0
          %2203 = vmatmul.mubr.bf16.gmra.mxu0 %v2041
          %v2204 = vpop.f32.mrf.mxu0
          %v2205 = vadd.f32 %v2072, %v2204
          %v2206 = vpop.f32.mrf.mxu0
          %v2207 = vpop.f32.mrf.mxu0
          %v2208 = vadd.f32 %v2072, %v2207
          %v2209 = vpop.f32.mrf.mxu0
          %2210 = vmatprep.mubr.bf16.mxu0 0
          %2211 = vmatmul.mubr.bf16.gmra.mxu0 %v2042
          %v2212 = vpop.f32.mrf.mxu0
          %v2213 = vadd.f32 %v2072, %v2212
          %v2214 = vpop.f32.mrf.mxu0
          %v2215 = vpop.f32.mrf.mxu0
          %v2216 = vadd.f32 %v2072, %v2215
          %v2217 = vpop.f32.mrf.mxu0
          %2218 = vmatprep.mubr.bf16.mxu0 0
          %2219 = vmatmul.mubr.bf16.gmra.mxu0 %v2043
          %v2220 = vpop.f32.mrf.mxu0
          %v2221 = vadd.f32 %v2072, %v2220
          %v2222 = vpop.f32.mrf.mxu0
          %v2223 = vpop.f32.mrf.mxu0
          %v2224 = vadd.f32 %v2072, %v2223
          %v2225 = vpop.f32.mrf.mxu0
          %2226 = vmatprep.mubr.bf16.mxu0 0
          %2227 = vmatmul.mubr.bf16.gmra.mxu0 %v2044
          %v2228 = vpop.f32.mrf.mxu0
          %v2229 = vadd.f32 %v2072, %v2228
          %v2230 = vpop.f32.mrf.mxu0
          %v2231 = vpop.f32.mrf.mxu0
          %v2232 = vadd.f32 %v2072, %v2231
          %v2233 = vpop.f32.mrf.mxu0
          %2234 = vmatprep.mubr.bf16.mxu0 0
          %2235 = vmatmul.mubr.bf16.gmra.mxu0 %v2045
          %v2236 = vpop.f32.mrf.mxu0
          %v2237 = vadd.f32 %v2072, %v2236
          %v2238 = vpop.f32.mrf.mxu0
          %v2239 = vpop.f32.mrf.mxu0
          %v2240 = vadd.f32 %v2072, %v2239
          %v2241 = vpop.f32.mrf.mxu0
          %2242 = vmatprep.mubr.bf16.mxu0 0
          %2243 = vmatmul.mubr.bf16.gmra.mxu0 %v2046
          %v2244 = vpop.f32.mrf.mxu0
          %v2245 = vadd.f32 %v2072, %v2244
          %v2246 = vpop.f32.mrf.mxu0
          %v2247 = vpop.f32.mrf.mxu0
          %v2248 = vadd.f32 %v2072, %v2247
          %v2249 = vpop.f32.mrf.mxu0
          %2250 = vmatprep.mubr.bf16.mxu0 0
          %2251 = vmatmul.mubr.bf16.gmra.mxu0 %v2047
          %v2252 = vpop.f32.mrf.mxu0
          %v2253 = vadd.f32 %v2072, %v2252
          %v2254 = vpop.f32.mrf.mxu0
          %v2255 = vpop.f32.mrf.mxu0
          %v2256 = vadd.f32 %v2072, %v2255
          %v2257 = vpop.f32.mrf.mxu0
          %2258 = vmatprep.mubr.bf16.mxu0 0
          %2259 = vmatmul.mubr.bf16.gmra.mxu0 %v2048
          %v2260 = vpop.f32.mrf.mxu0
          %v2261 = vadd.f32 %v2072, %v2260
          %v2262 = vpop.f32.mrf.mxu0
          %v2263 = vpop.f32.mrf.mxu0
          %v2264 = vadd.f32 %v2072, %v2263
          %v2265 = vpop.f32.mrf.mxu0
          %2266 = vmatprep.mubr.bf16.mxu0 0
          %2267 = vmatmul.mubr.bf16.gmra.mxu0 %v2049
          %v2268 = vpop.f32.mrf.mxu0
          %v2269 = vadd.f32 %v2072, %v2268
          %v2270 = vpop.f32.mrf.mxu0
          %v2271 = vpop.f32.mrf.mxu0
          %v2272 = vadd.f32 %v2072, %v2271
          %v2273 = vpop.f32.mrf.mxu0
          %2274 = vmatprep.mubr.bf16.mxu0 0
          %2275 = vmatmul.mubr.bf16.gmra.mxu0 %v2050
          %v2276 = vpop.f32.mrf.mxu0
          %v2277 = vadd.f32 %v2072, %v2276
          %v2278 = vpop.f32.mrf.mxu0
          %v2279 = vpop.f32.mrf.mxu0
          %v2280 = vadd.f32 %v2072, %v2279
          %v2281 = vpop.f32.mrf.mxu0
          %2282 = vdwg.mxu0
          %v2283 = vmax.f32 %v2157, 0.0
          %v2284 = vmax.f32 %v2160, 0.0
          %v2285 = vmax.f32 %v2165, 0.0
          %v2286 = vmax.f32 %v2168, 0.0
          %v2287 = vmax.f32 %v2173, 0.0
          %v2288 = vmax.f32 %v2176, 0.0
          %v2289 = vmax.f32 %v2181, 0.0
          %v2290 = vmax.f32 %v2184, 0.0
          %v2291 = vmax.f32 %v2189, 0.0
          %v2292 = vmax.f32 %v2192, 0.0
          %v2293 = vmax.f32 %v2197, 0.0
          %v2294 = vmax.f32 %v2200, 0.0
          %v2295 = vmax.f32 %v2205, 0.0
          %v2296 = vmax.f32 %v2208, 0.0
          %v2297 = vmax.f32 %v2213, 0.0
          %v2298 = vmax.f32 %v2216, 0.0
          %v2299 = vmax.f32 %v2221, 0.0
          %v2300 = vmax.f32 %v2224, 0.0
          %v2301 = vmax.f32 %v2229, 0.0
          %v2302 = vmax.f32 %v2232, 0.0
          %v2303 = vmax.f32 %v2237, 0.0
          %v2304 = vmax.f32 %v2240, 0.0
          %v2305 = vmax.f32 %v2245, 0.0
          %v2306 = vmax.f32 %v2248, 0.0
          %v2307 = vmax.f32 %v2253, 0.0
          %v2308 = vmax.f32 %v2256, 0.0
          %v2309 = vmax.f32 %v2261, 0.0
          %v2310 = vmax.f32 %v2264, 0.0
          %v2311 = vmax.f32 %v2269, 0.0
          %v2312 = vmax.f32 %v2272, 0.0
          %v2313 = vmax.f32 %v2277, 0.0
          %v2314 = vmax.f32 %v2280, 0.0
          %2315 = vst [vmem:[%s489] sm:$0xff] %v2283
          %2316 = vst [vmem:[%s489 + $0x8] sm:$0xff] %v2284
          %2317 = vst [vmem:[%s489 + $0x10] sm:$0xff] %v2285
          %2318 = vst [vmem:[%s489 + $0x18] sm:$0xff] %v2286
          %2319 = vst [vmem:[%s489 + $0x20] sm:$0xff] %v2287
          %2320 = vst [vmem:[%s489 + $0x28] sm:$0xff] %v2288
          %2321 = vst [vmem:[%s489 + $0x30] sm:$0xff] %v2289
          %2322 = vst [vmem:[%s489 + $0x38] sm:$0xff] %v2290
          %2323 = vst [vmem:[%s489 + $0x40] sm:$0xff] %v2291
          %2324 = vst [vmem:[%s489 + $0x48] sm:$0xff] %v2292
          %2325 = vst [vmem:[%s489 + $0x50] sm:$0xff] %v2293
          %2326 = vst [vmem:[%s489 + $0x58] sm:$0xff] %v2294
          %2327 = vst [vmem:[%s489 + $0x60] sm:$0xff] %v2295
          %2328 = vst [vmem:[%s489 + $0x68] sm:$0xff] %v2296
          %2329 = vst [vmem:[%s489 + $0x70] sm:$0xff] %v2297
          %2330 = vst [vmem:[%s489 + $0x78] sm:$0xff] %v2298
          %2331 = vst [vmem:[%s489 + $0x80] sm:$0xff] %v2299
          %2332 = vst [vmem:[%s489 + $0x88] sm:$0xff] %v2300
          %2333 = vst [vmem:[%s489 + $0x90] sm:$0xff] %v2301
          %2334 = vst [vmem:[%s489 + $0x98] sm:$0xff] %v2302
          %2335 = vst [vmem:[%s489 + $0xa0] sm:$0xff] %v2303
          %2336 = vst [vmem:[%s489 + $0xa8] sm:$0xff] %v2304
          %2337 = vst [vmem:[%s489 + $0xb0] sm:$0xff] %v2305
          %2338 = vst [vmem:[%s489 + $0xb8] sm:$0xff] %v2306
          %2339 = vst [vmem:[%s489 + $0xc0] sm:$0xff] %v2307
          %2340 = vst [vmem:[%s489 + $0xc8] sm:$0xff] %v2308
          %2341 = vst [vmem:[%s489 + $0xd0] sm:$0xff] %v2309
          %2342 = vst [vmem:[%s489 + $0xd8] sm:$0xff] %v2310
          %2343 = vst [vmem:[%s489 + $0xe0] sm:$0xff] %v2311
          %2344 = vst [vmem:[%s489 + $0xe8] sm:$0xff] %v2312
          %2345 = vst [vmem:[%s489 + $0xf0] sm:$0xff] %v2313
          %2346 = vst [vmem:[%s489 + $0xf8] sm:$0xff] %v2314
        $region72: #{tpu_custom_call.1} parent=51 // pred_fallthru
          _
        %s2347 = sand.u32 %s242, 1
        %s2348 = scalar_lea.sflag [#allocation5], %s2347
        %s2349 = sand.u32 %s242, 1
        %s2350 = smul.addr %s2349, 256
        %s2351 = scalar_lea.vmem [#allocation9], %s2350
        %s2352 = sand.u32 %s32, 1
        %s2353 = scalar_lea.sflag [#allocation11], %s2352
        %s2354 = sand.u32 %s268, 1
        %s2355 = smul.addr %s2354, 128
        %s2356 = scalar_lea.vmem [#allocation10], %s2355
        %s2357 = sand.u32 %s32, 1
        %s2358 = scalar_lea.sflag [#allocation11], %s2357
        %s2359 = sand.u32 %s294, 1
        %s2360 = smul.addr %s2359, 256
        %s2361 = scalar_lea.vmem [#allocation12], %s2360
        // Predicated region
        $region73: #{tpu_custom_call.1} parent=51 // pred_check
          %p2362 = pneg %p252
        $region74: #{tpu_custom_call.1} parent=51 // pred_check_branch
          %2364 = sbr.rel (%p2362) target = $region76
        $region75: #{tpu_custom_call.1} parent=51 // pred_region
          %s2365 = smul.u32 32, %s36
          %s2367 = ssub.s32 4096, 4096
          %2368 = vsyncadd %s2348, %s2367
          %s2369 = smul.addr %s2365, 128
          %s2370 = scalar_lea.hbm %s8, %s2369
          %s2371 = sshll.u32 %s2351, 4
          %s2372 = int_to_ptr.vmem [resolvable:$true] %s2371
          %2377 = dma.vmem_to_hbm [thread:$0]  %s2372, 4096, %s2370, %s2348, 128, 128, 8
        $region76: #{tpu_custom_call.1} parent=51 // pred_fallthru
          _
        // Predicated region
        $region77: #{tpu_custom_call.1} parent=51 // pred_check
          %p2378 = pneg %p278
        $region78: #{tpu_custom_call.1} parent=51 // pred_check_branch
          %2380 = sbr.rel (%p2378) target = $region80
        $region79: #{tpu_custom_call.1} parent=51 // pred_region
          %s2381 = smul.u32 32, %s36
          %s2383 = ssub.s32 2048, 2048
          %2384 = vsyncadd %s2353, %s2383
          %s2385 = smul.addr %s2381, 64
          %s2386 = scalar_lea.hbm %s9, %s2385
          %s2387 = sshll.u32 %s2356, 4
          %s2388 = int_to_ptr.vmem [resolvable:$true] %s2387
          %2393 = dma.vmem_to_hbm [thread:$0]  %s2388, 2048, %s2386, %s2353, 64, 64, 4
        $region80: #{tpu_custom_call.1} parent=51 // pred_fallthru
          _
        // Predicated region
        $region81: #{tpu_custom_call.1} parent=51 // pred_check
          %p2394 = pneg %p304
        $region82: #{tpu_custom_call.1} parent=51 // pred_check_branch
          %2396 = sbr.rel (%p2394) target = $region84
        $region83: #{tpu_custom_call.1} parent=51 // pred_region
          %s2397 = smul.u32 32, %s36
          %s2399 = ssub.s32 4096, 4096
          %2400 = vsyncadd %s2358, %s2399
          %s2401 = smul.addr %s2397, 128
          %s2402 = scalar_lea.hbm %s10, %s2401
          %s2403 = sshll.u32 %s2361, 4
          %s2404 = int_to_ptr.vmem [resolvable:$true] %s2403
          %2409 = dma.vmem_to_hbm [thread:$0]  %s2404, 4096, %s2402, %s2358, 128, 128, 8
        $region84: #{tpu_custom_call.1} parent=51 // pred_fallthru
          _
      $region52: #{tpu_custom_call.1} parent=5 // pred_fallthru
        _
      %p2410 = scmp.le.s32.totalorder 2, %s27
      // Predicated region
      $region85: #{tpu_custom_call.1} parent=5 // pred_check
        %p2411 = pneg %p2410
      $region86: #{tpu_custom_call.1} parent=5 // pred_check_branch
        %2413 = sbr.rel (%p2411) target = $region88
      $region87: #{tpu_custom_call.1} parent=5 // pred_region
        %s2414 = ssub.s32 %s27, 2
        // Predicated region
        $region89: #{tpu_custom_call.1} parent=87 // pred_check
          %p2415 = pneg %p258
        $region90: #{tpu_custom_call.1} parent=87 // pred_check_branch
          %2417 = sbr.rel (%p2415) target = $region92
        $region91: #{tpu_custom_call.1} parent=87 // pred_region
          %s2418 = sand.u32 %s243, 1
          %s2419 = scalar_lea.sflag [#allocation5], %s2418
          %s2420 = sand.u32 %s243, 1
          %s2421 = smul.addr %s2420, 256
          %s2422 = scalar_lea.vmem [#allocation9], %s2421
          %2423 = dma.done %s2419, 4096
        $region92: #{tpu_custom_call.1} parent=87 // pred_fallthru
          _
        // Predicated region
        $region93: #{tpu_custom_call.1} parent=87 // pred_check
          %p2424 = pneg %p284
        $region94: #{tpu_custom_call.1} parent=87 // pred_check_branch
          %2426 = sbr.rel (%p2424) target = $region96
        $region95: #{tpu_custom_call.1} parent=87 // pred_region
          %s2427 = sand.u32 %s33, 1
          %s2428 = scalar_lea.sflag [#allocation11], %s2427
          %s2429 = sand.u32 %s269, 1
          %s2430 = smul.addr %s2429, 128
          %s2431 = scalar_lea.vmem [#allocation10], %s2430
          %2432 = dma.done %s2428, 2048
        $region96: #{tpu_custom_call.1} parent=87 // pred_fallthru
          _
        // Predicated region
        $region97: #{tpu_custom_call.1} parent=87 // pred_check
          %p2433 = pneg %p310
        $region98: #{tpu_custom_call.1} parent=87 // pred_check_branch
          %2435 = sbr.rel (%p2433) target = $region100
        $region99: #{tpu_custom_call.1} parent=87 // pred_region
          %s2436 = sand.u32 %s33, 1
          %s2437 = scalar_lea.sflag [#allocation11], %s2436
          %s2438 = sand.u32 %s295, 1
          %s2439 = smul.addr %s2438, 256
          %s2440 = scalar_lea.vmem [#allocation12], %s2439
          %2441 = dma.done %s2437, 4096
        $region100: #{tpu_custom_call.1} parent=87 // pred_fallthru
          _
      $region88: #{tpu_custom_call.1} parent=5 // pred_fallthru
        _
    $region6: #{tpu_custom_call.1} parent=1 // loop_footer
      %s31 = sadd.s32 1, %s27
    $region7: #{tpu_custom_call.1} parent=1 // loop_footer_branch
      %26 = sbr.rel target = $region3
    $region8: #{tpu_custom_call.1} parent=1 // loop_exit
      _
    %2442 = vsyncpa [#allocation4], 1
    %s2443 = scalar_lea.sflag [#allocation4], 1
    %2444 = vsyncpa %s2443, 1
    %2445 = vsyncpa [#allocation7], 1
    %2446 = vsyncpa [#allocation5], 1
    %s2447 = scalar_lea.sflag [#allocation5], 1
    %2448 = vsyncpa %s2447, 1
    %2449 = vsyncpa [#allocation11], 1
    %s2450 = scalar_lea.sflag [#allocation11], 1
    %2451 = vsyncpa %s2450, 1

</llo_original>
